<compile_context>
chip_gen: v6e
topology: v6e:2x2x1
jax: 0.10.0
libtpu: 0.0.40
codegen_flags: <defaults>
</compile_context>

<pallas_src>
import functools

import jax
import jax.numpy as jnp
from jax.experimental import pallas as pl
from jax.experimental.pallas import tpu as pltpu


def _layernorm(x, gamma, beta, eps=1e-5):
    mean = jnp.mean(x, axis=-1, keepdims=True)
    var = jnp.mean((x - mean) ** 2, axis=-1, keepdims=True)   # population var (torch)
    return (x - mean) * jax.lax.rsqrt(var + eps) * gamma + beta


def _reasoning_kernel(batch, seq, num_heads, head_dim,
                      x_ref, wqkv_ref, wo_ref, w1_ref, w2_ref, vec_ref,
                      out_ref):
    H = num_heads * head_dim
    dh = head_dim
    x = x_ref[...]                                   # (B*S, H) f32, batch-major rows
    x_bf = x.astype(jnp.bfloat16)

    # Packed small params (one (8, 4H) f32 slab), rows zero-padded to 4H lanes.
    b_qkv = vec_ref[0:1, :3 * H]                     # head-major fused qkv bias (q part pre-scaled)
    bo    = vec_ref[1:2, :H]
    g1    = vec_ref[2:3, :H]
    b1n   = vec_ref[3:4, :H]
    b1f   = vec_ref[4:5, :]                          # (1, 4H)
    b2f   = vec_ref[5:6, :H]
    g2    = vec_ref[6:7, :H]
    b2n   = vec_ref[7:8, :H]

    # ----- fused QKV projection over ALL batch rows at once (M = B*S) -----
    # Weight columns are head-major: per head [q(dh) | k(dh) | v(dh)];
    # the 1/sqrt(dh) scale is already folded into the q columns / bias.
    qkv = jnp.dot(x_bf, wqkv_ref[...],
                  preferred_element_type=jnp.float32) + b_qkv         # (B*S, 3H) f32

    # (B*nH, S, 3*dh): one static 2-D slice per (batch, head), single stack.
    blocks = jnp.stack(
        [qkv[b * seq:(b + 1) * seq, g * 3 * dh:(g + 1) * 3 * dh]
         for b in range(batch) for g in range(num_heads)], axis=0)

    q_h = blocks[..., :dh].astype(jnp.bfloat16)                       # (B*nH, S, dh)
    k_h = blocks[..., dh:2 * dh].astype(jnp.bfloat16)
    v_h = blocks[..., 2 * dh:].astype(jnp.bfloat16)

    # ----- attention: batched over B*nH heads (scale already folded) -----
    s = jnp.einsum("hqd,hkd->hqk", q_h, k_h,
                   preferred_element_type=jnp.float32)                # (B*nH, S, S)
    s = s - jnp.max(s, axis=-1, keepdims=True)
    p = jnp.exp(s)
    p = p * pl.reciprocal(jnp.sum(p, axis=-1, keepdims=True), approx=True)
    ctx = jnp.einsum("hqk,hkd->hqd", p.astype(jnp.bfloat16), v_h,
                     preferred_element_type=jnp.float32)              # (B*nH, S, dh)

    # Merge heads back: lane concat per batch, sublane concat across batches.
    attended = jnp.concatenate(
        [jnp.concatenate([ctx[b * num_heads + g] for g in range(num_heads)], axis=-1)
         for b in range(batch)], axis=0)                              # (B*S, H)
    attended = jnp.dot(attended.astype(jnp.bfloat16), wo_ref[...],
                       preferred_element_type=jnp.float32) + bo

    # ----- residual + norm1 -----
    x1 = _layernorm(x + attended, g1, b1n)

    # ----- feed-forward (Linear -> exact GELU -> Linear), M = B*S -----
    h1 = jnp.dot(x1.astype(jnp.bfloat16), w1_ref[...],
                 preferred_element_type=jnp.float32) + b1f
    h1 = 0.5 * h1 * (1.0 + jax.lax.erf(h1 * (2.0 ** -0.5)))           # exact GELU
    ff = jnp.dot(h1.astype(jnp.bfloat16), w2_ref[...],
                 preferred_element_type=jnp.float32) + b2f

    # ----- residual + norm2 -----
    out_ref[...] = _layernorm(x1 + ff, g2, b2n)


def reasoning_forward(x, params, num_heads):
    """x: (seq, batch, hidden) float32 — torch MHA convention (batch_first=False)."""
    S, B, H = x.shape
    dh = H // num_heads
    scale = 1.0 / (dh ** 0.5)

    # Fold batch into the row dim: (S, B, H) -> (B*S, H), batch-major rows.
    x2d = jnp.transpose(x, (1, 0, 2)).reshape(B * S, H)

    # Head-major fused QKV weight / bias; fold 1/sqrt(dh) into the q columns.
    w_blocks, b_blocks = [], []
    for h in range(num_heads):
        sl = slice(h * dh, (h + 1) * dh)
        w_blocks += [params["wq_t"][:, sl] * scale,
                     params["wk_t"][:, sl],
                     params["wv_t"][:, sl]]
        b_blocks += [params["bq"][sl] * scale,
                     params["bk"][sl],
                     params["bv"][sl]]
    wqkv = jnp.concatenate(w_blocks, axis=1).astype(jnp.bfloat16)      # (H, 3H)
    b_qkv = jnp.concatenate(b_blocks)                                  # (3H,)

    wo = params["wo_t"].astype(jnp.bfloat16)                           # (H, H)
    w1 = params["w1_t"].astype(jnp.bfloat16)                           # (H, 4H)
    w2 = params["w2_t"].astype(jnp.bfloat16)                           # (4H, H)

    def pad_row(v):
        return jnp.pad(v, (0, 4 * H - v.shape[0]))

    vec = jnp.stack([
        pad_row(b_qkv),
        pad_row(params["bo"]),
        pad_row(params["g1"]),
        pad_row(params["b1n"]),
        params["b1f"],
        pad_row(params["b2f"]),
        pad_row(params["g2"]),
        pad_row(params["b2n"]),
    ], axis=0).astype(jnp.float32)                                     # (8, 4H)

    kern = functools.partial(_reasoning_kernel, B, S, num_heads, dh)

    out = pl.pallas_call(
        kern,
        out_shape=jax.ShapeDtypeStruct((B * S, H), jnp.float32),
        grid=(1,),                                                     # single step: all work folded
        in_specs=[
            pl.BlockSpec((B * S, H), lambda i: (0, 0)),     # x (batch folded into rows)
            pl.BlockSpec((H, 3 * H), lambda i: (0, 0)),     # fused head-major qkv weight
            pl.BlockSpec((H, H), lambda i: (0, 0)),         # out-proj weight
            pl.BlockSpec((H, 4 * H), lambda i: (0, 0)),     # ffn w1
            pl.BlockSpec((4 * H, H), lambda i: (0, 0)),     # ffn w2
            pl.BlockSpec((8, 4 * H), lambda i: (0, 0)),     # packed biases / LN params
        ],
        out_specs=pl.BlockSpec((B * S, H), lambda i: (0, 0)),
        compiler_params=pltpu.CompilerParams(
            dimension_semantics=("arbitrary",),
            vmem_limit_bytes=32 * 1024 * 1024,
        ),
    )(x2d, wqkv, wo, w1, w2, vec)

    return jnp.transpose(out.reshape(B, S, H), (1, 0, 2))              # back to (S, B, H)


def make_params(key, hidden):
    """Deterministic synthetic parameters mirroring the module's shapes."""
    ks = jax.random.split(key, 12)
    H = hidden
    scale = 0.05
    in_proj_w = scale * jax.random.normal(ks[0], (3 * H, H), jnp.float32)
    in_proj_b = scale * jax.random.normal(ks[1], (3 * H,), jnp.float32)
    wq, wk, wv = in_proj_w[:H], in_proj_w[H:2 * H], in_proj_w[2 * H:]
    bq, bk, bv = in_proj_b[:H], in_proj_b[H:2 * H], in_proj_b[2 * H:]
    wo = scale * jax.random.normal(ks[2], (H, H), jnp.float32)
    bo = scale * jax.random.normal(ks[3], (H,), jnp.float32)
    w1 = scale * jax.random.normal(ks[4], (4 * H, H), jnp.float32)
    b1f = scale * jax.random.normal(ks[5], (4 * H,), jnp.float32)
    w2 = scale * jax.random.normal(ks[6], (H, 4 * H), jnp.float32)
    b2f = scale * jax.random.normal(ks[7], (H,), jnp.float32)
    g1 = 1.0 + 0.1 * jax.random.normal(ks[8], (H,), jnp.float32)
    b1n = 0.1 * jax.random.normal(ks[9], (H,), jnp.float32)
    g2 = 1.0 + 0.1 * jax.random.normal(ks[10], (H,), jnp.float32)
    b2n = 0.1 * jax.random.normal(ks[11], (H,), jnp.float32)

    # Pre-transpose linear weights so the kernel does x @ W^T as x @ W_t.
    return {
        "wq_t": wq.T, "wk_t": wk.T, "wv_t": wv.T,
        "bq": bq, "bk": bk, "bv": bv,
        "wo_t": wo.T, "bo": bo,
        "g1": g1, "b1n": b1n,
        "w1_t": w1.T, "b1f": b1f,
        "w2_t": w2.T, "b2f": b2f,
        "g2": g2, "b2n": b2n,
    }


def reference_forward(x, params, num_heads):
    """Pure-JAX f32 reference of the same math for validation."""
    S, B, H = x.shape
    dh = H // num_heads
    xb = jnp.transpose(x, (1, 0, 2))                                  # (B, S, H)

    def one(xs):
        q = xs @ params["wq_t"] + params["bq"]
        k = xs @ params["wk_t"] + params["bk"]
        v = xs @ params["wv_t"] + params["bv"]
        qh = q.reshape(S, num_heads, dh).transpose(1, 0, 2)
        kh = k.reshape(S, num_heads, dh).transpose(1, 0, 2)
        vh = v.reshape(S, num_heads, dh).transpose(1, 0, 2)
        s = jnp.einsum("hqd,hkd->hqk", qh, kh) / (dh ** 0.5)
        p = jax.nn.softmax(s, axis=-1)
        o = jnp.einsum("hqk,hkd->hqd", p, vh).transpose(1, 0, 2).reshape(S, H)
        att = o @ params["wo_t"] + params["bo"]
        x1 = _layernorm(xs + att, params["g1"], params["b1n"])
        h1 = x1 @ params["w1_t"] + params["b1f"]
        h1 = 0.5 * h1 * (1.0 + jax.lax.erf(h1 * (2.0 ** -0.5)))
        ff = h1 @ params["w2_t"] + params["b2f"]
        return _layernorm(x1 + ff, params["g2"], params["b2n"])

    out = jax.vmap(one)(xb)
    return jnp.transpose(out, (1, 0, 2))


if __name__ == "__main__":
    HIDDEN = 32
    NUM_HEADS = 8
    SEQ = 8
    BATCH = 2

    key = jax.random.PRNGKey(0)
    kx, kp = jax.random.split(key)
    x = jax.random.normal(kx, (SEQ, BATCH, HIDDEN), jnp.float32)
    params = make_params(kp, HIDDEN)

    out = reasoning_forward(x, params, NUM_HEADS)
    out = jax.block_until_ready(out)

    ref = reference_forward(x, params, NUM_HEADS)
    assert out.shape == (SEQ, BATCH, HIDDEN)
    # bf16 matmuls (f32 accumulation) + approx reciprocal vs f32 reference.
    assert jnp.allclose(out, ref, atol=3e-2, rtol=3e-2), "mismatch vs reference"

    print("KERNEL_OK")
</pallas_src>

<mosaic_0001>
module attributes {stable_mosaic.version = 11 : i64} {
  func.func @_reasoning_kernel(%arg0: i32, %arg1: memref<16x32xf32, #tpu.memory_space<vmem>>, %arg2: memref<32x96xbf16, #tpu.memory_space<vmem>>, %arg3: memref<32x32xbf16, #tpu.memory_space<vmem>>, %arg4: memref<32x128xbf16, #tpu.memory_space<vmem>>, %arg5: memref<128x32xbf16, #tpu.memory_space<vmem>>, %arg6: memref<8x128xf32, #tpu.memory_space<vmem>>, %arg7: memref<16x32xf32, #tpu.memory_space<vmem>>) attributes {dimension_semantics = [#tpu.dimension_semantics<arbitrary>], iteration_bounds = array<i64: 1>, scalar_prefetch = 0 : i64, scratch_operands = 0 : i64, tpu.core_type = #tpu.core_type<tc>, window_params = [{pipeline_mode = #tpu.pipeline_mode<synchronous>, transform_indices = @transform_0, window_bounds = array<i64: 16, 32>}, {pipeline_mode = #tpu.pipeline_mode<synchronous>, transform_indices = @transform_1, window_bounds = array<i64: 32, 96>}, {pipeline_mode = #tpu.pipeline_mode<synchronous>, transform_indices = @transform_2, window_bounds = array<i64: 32, 32>}, {pipeline_mode = #tpu.pipeline_mode<synchronous>, transform_indices = @transform_3, window_bounds = array<i64: 32, 128>}, {pipeline_mode = #tpu.pipeline_mode<synchronous>, transform_indices = @transform_4, window_bounds = array<i64: 128, 32>}, {pipeline_mode = #tpu.pipeline_mode<synchronous>, transform_indices = @transform_5, window_bounds = array<i64: 8, 128>}, {pipeline_mode = #tpu.pipeline_mode<synchronous>, transform_indices = @transform_6, window_bounds = array<i64: 16, 32>}]} {
    %c0 = arith.constant 0 : index
    %c0_0 = arith.constant 0 : index
    %0 = vector.load %arg1[%c0, %c0_0] : memref<16x32xf32, #tpu.memory_space<vmem>>, vector<16x32xf32>
    %1 = arith.truncf %0 : vector<16x32xf32> to vector<16x32xbf16>
    %c0_1 = arith.constant 0 : index
    %c0_2 = arith.constant 0 : index
    %2 = vector.load %arg6[%c0_1, %c0_2] : memref<8x128xf32, #tpu.memory_space<vmem>>, vector<1x96xf32>
    %c1 = arith.constant 1 : index
    %c0_3 = arith.constant 0 : index
    %3 = vector.load %arg6[%c1, %c0_3] : memref<8x128xf32, #tpu.memory_space<vmem>>, vector<1x32xf32>
    %c2 = arith.constant 2 : index
    %c0_4 = arith.constant 0 : index
    %4 = vector.load %arg6[%c2, %c0_4] : memref<8x128xf32, #tpu.memory_space<vmem>>, vector<1x32xf32>
    %c3 = arith.constant 3 : index
    %c0_5 = arith.constant 0 : index
    %5 = vector.load %arg6[%c3, %c0_5] : memref<8x128xf32, #tpu.memory_space<vmem>>, vector<1x32xf32>
    %c4 = arith.constant 4 : index
    %c0_6 = arith.constant 0 : index
    %6 = vector.load %arg6[%c4, %c0_6] : memref<8x128xf32, #tpu.memory_space<vmem>>, vector<1x128xf32>
    %c5 = arith.constant 5 : index
    %c0_7 = arith.constant 0 : index
    %7 = vector.load %arg6[%c5, %c0_7] : memref<8x128xf32, #tpu.memory_space<vmem>>, vector<1x32xf32>
    %c6 = arith.constant 6 : index
    %c0_8 = arith.constant 0 : index
    %8 = vector.load %arg6[%c6, %c0_8] : memref<8x128xf32, #tpu.memory_space<vmem>>, vector<1x32xf32>
    %c7 = arith.constant 7 : index
    %c0_9 = arith.constant 0 : index
    %9 = vector.load %arg6[%c7, %c0_9] : memref<8x128xf32, #tpu.memory_space<vmem>>, vector<1x32xf32>
    %c0_10 = arith.constant 0 : index
    %c0_11 = arith.constant 0 : index
    %10 = vector.load %arg2[%c0_10, %c0_11] : memref<32x96xbf16, #tpu.memory_space<vmem>>, vector<32x96xbf16>
    %cst = arith.constant dense<0.000000e+00> : vector<16x96xf32>
    %11 = tpu.matmul %1, %10, %cst {dimension_numbers = #tpu.dot_dimension_numbers<[1], [0], [0], [1], [0, 0, 1, 1], [], []>} : vector<16x32xbf16>, vector<32x96xbf16>, vector<16x96xf32> -> vector<16x96xf32>
    %12 = vector.broadcast %2 : vector<1x96xf32> to vector<16x96xf32>
    %13 = arith.addf %11, %12 : vector<16x96xf32>
    %14 = vector.extract_strided_slice %13 {offsets = [0, 0], sizes = [8, 12], strides = [1, 1]} : vector<16x96xf32> to vector<8x12xf32>
    %15 = vector.extract_strided_slice %13 {offsets = [0, 12], sizes = [8, 12], strides = [1, 1]} : vector<16x96xf32> to vector<8x12xf32>
    %16 = vector.extract_strided_slice %13 {offsets = [0, 24], sizes = [8, 12], strides = [1, 1]} : vector<16x96xf32> to vector<8x12xf32>
    %17 = vector.extract_strided_slice %13 {offsets = [0, 36], sizes = [8, 12], strides = [1, 1]} : vector<16x96xf32> to vector<8x12xf32>
    %18 = vector.extract_strided_slice %13 {offsets = [0, 48], sizes = [8, 12], strides = [1, 1]} : vector<16x96xf32> to vector<8x12xf32>
    %19 = vector.extract_strided_slice %13 {offsets = [0, 60], sizes = [8, 12], strides = [1, 1]} : vector<16x96xf32> to vector<8x12xf32>
    %20 = vector.extract_strided_slice %13 {offsets = [0, 72], sizes = [8, 12], strides = [1, 1]} : vector<16x96xf32> to vector<8x12xf32>
    %21 = vector.extract_strided_slice %13 {offsets = [0, 84], sizes = [8, 12], strides = [1, 1]} : vector<16x96xf32> to vector<8x12xf32>
    %22 = vector.extract_strided_slice %13 {offsets = [8, 0], sizes = [8, 12], strides = [1, 1]} : vector<16x96xf32> to vector<8x12xf32>
    %23 = vector.extract_strided_slice %13 {offsets = [8, 12], sizes = [8, 12], strides = [1, 1]} : vector<16x96xf32> to vector<8x12xf32>
    %24 = vector.extract_strided_slice %13 {offsets = [8, 24], sizes = [8, 12], strides = [1, 1]} : vector<16x96xf32> to vector<8x12xf32>
    %25 = vector.extract_strided_slice %13 {offsets = [8, 36], sizes = [8, 12], strides = [1, 1]} : vector<16x96xf32> to vector<8x12xf32>
    %26 = vector.extract_strided_slice %13 {offsets = [8, 48], sizes = [8, 12], strides = [1, 1]} : vector<16x96xf32> to vector<8x12xf32>
    %27 = vector.extract_strided_slice %13 {offsets = [8, 60], sizes = [8, 12], strides = [1, 1]} : vector<16x96xf32> to vector<8x12xf32>
    %28 = vector.extract_strided_slice %13 {offsets = [8, 72], sizes = [8, 12], strides = [1, 1]} : vector<16x96xf32> to vector<8x12xf32>
    %29 = vector.extract_strided_slice %13 {offsets = [8, 84], sizes = [8, 12], strides = [1, 1]} : vector<16x96xf32> to vector<8x12xf32>
    %30 = vector.shape_cast %14 : vector<8x12xf32> to vector<1x8x12xf32>
    %31 = vector.shape_cast %15 : vector<8x12xf32> to vector<1x8x12xf32>
    %32 = vector.shape_cast %16 : vector<8x12xf32> to vector<1x8x12xf32>
    %33 = vector.shape_cast %17 : vector<8x12xf32> to vector<1x8x12xf32>
    %34 = vector.shape_cast %18 : vector<8x12xf32> to vector<1x8x12xf32>
    %35 = vector.shape_cast %19 : vector<8x12xf32> to vector<1x8x12xf32>
    %36 = vector.shape_cast %20 : vector<8x12xf32> to vector<1x8x12xf32>
    %37 = vector.shape_cast %21 : vector<8x12xf32> to vector<1x8x12xf32>
    %38 = vector.shape_cast %22 : vector<8x12xf32> to vector<1x8x12xf32>
    %39 = vector.shape_cast %23 : vector<8x12xf32> to vector<1x8x12xf32>
    %40 = vector.shape_cast %24 : vector<8x12xf32> to vector<1x8x12xf32>
    %41 = vector.shape_cast %25 : vector<8x12xf32> to vector<1x8x12xf32>
    %42 = vector.shape_cast %26 : vector<8x12xf32> to vector<1x8x12xf32>
    %43 = vector.shape_cast %27 : vector<8x12xf32> to vector<1x8x12xf32>
    %44 = vector.shape_cast %28 : vector<8x12xf32> to vector<1x8x12xf32>
    %45 = vector.shape_cast %29 : vector<8x12xf32> to vector<1x8x12xf32>
    %46 = tpu.concatenate %30, %31, %32, %33, %34, %35, %36, %37, %38, %39, %40, %41, %42, %43, %44, %45 in 0 : vector<1x8x12xf32>, vector<1x8x12xf32>, vector<1x8x12xf32>, vector<1x8x12xf32>, vector<1x8x12xf32>, vector<1x8x12xf32>, vector<1x8x12xf32>, vector<1x8x12xf32>, vector<1x8x12xf32>, vector<1x8x12xf32>, vector<1x8x12xf32>, vector<1x8x12xf32>, vector<1x8x12xf32>, vector<1x8x12xf32>, vector<1x8x12xf32>, vector<1x8x12xf32> -> vector<16x8x12xf32>
    %47 = vector.extract_strided_slice %46 {offsets = [0, 0, 0], sizes = [16, 8, 4], strides = [1, 1, 1]} : vector<16x8x12xf32> to vector<16x8x4xf32>
    %48 = arith.truncf %47 : vector<16x8x4xf32> to vector<16x8x4xbf16>
    %49 = vector.extract_strided_slice %46 {offsets = [0, 0, 4], sizes = [16, 8, 4], strides = [1, 1, 1]} : vector<16x8x12xf32> to vector<16x8x4xf32>
    %50 = arith.truncf %49 : vector<16x8x4xf32> to vector<16x8x4xbf16>
    %51 = vector.extract_strided_slice %46 {offsets = [0, 0, 8], sizes = [16, 8, 4], strides = [1, 1, 1]} : vector<16x8x12xf32> to vector<16x8x4xf32>
    %52 = arith.truncf %51 : vector<16x8x4xf32> to vector<16x8x4xbf16>
    "tpu.trace_start"() <{level = 10 : i32, message = "hqd,hkd->hqk"}> : () -> ()
    %cst_12 = arith.constant dense<0.000000e+00> : vector<16x8x8xf32>
    %53 = tpu.matmul %48, %50, %cst_12 {dimension_numbers = #tpu.dot_dimension_numbers<[2], [2], [1], [1], [0, 0, 0, 1, 1, 1], [0], [0]>} : vector<16x8x4xbf16>, vector<16x8x4xbf16>, vector<16x8x8xf32> -> vector<16x8x8xf32>
    "tpu.trace_stop"() : () -> ()
    %cst_13 = arith.constant dense<0xFF800000> : vector<16x8xf32>
    %54 = vector.multi_reduction <maximumf>, %53, %cst_13 [2] : vector<16x8x8xf32> to vector<16x8xf32>
    %55 = vector.shape_cast %54 : vector<16x8xf32> to vector<16x8x1xf32>
    %56 = vector.broadcast %55 : vector<16x8x1xf32> to vector<16x8x8xf32>
    %57 = arith.subf %53, %56 : vector<16x8x8xf32>
    %58 = math.exp %57 : vector<16x8x8xf32>
    %cst_14 = arith.constant dense<0.000000e+00> : vector<16x8xf32>
    %59 = vector.multi_reduction <add>, %58, %cst_14 [2] : vector<16x8x8xf32> to vector<16x8xf32>
    %60 = vector.shape_cast %59 : vector<16x8xf32> to vector<16x8x1xf32>
    %61 = tpu.reciprocal %60 {approx = true} : vector<16x8x1xf32> -> vector<16x8x1xf32>
    %62 = vector.broadcast %61 : vector<16x8x1xf32> to vector<16x8x8xf32>
    %63 = arith.mulf %58, %62 : vector<16x8x8xf32>
    %64 = arith.truncf %63 : vector<16x8x8xf32> to vector<16x8x8xbf16>
    "tpu.trace_start"() <{level = 10 : i32, message = "hqk,hkd->hqd"}> : () -> ()
    %cst_15 = arith.constant dense<0.000000e+00> : vector<16x8x4xf32>
    %65 = tpu.matmul %64, %52, %cst_15 {dimension_numbers = #tpu.dot_dimension_numbers<[2], [1], [1], [2], [0, 0, 0, 1, 1, 2], [0], [0]>} : vector<16x8x8xbf16>, vector<16x8x4xbf16>, vector<16x8x4xf32> -> vector<16x8x4xf32>
    "tpu.trace_stop"() : () -> ()
    %66 = vector.extract_strided_slice %65 {offsets = [0, 0, 0], sizes = [1, 8, 4], strides = [1, 1, 1]} : vector<16x8x4xf32> to vector<1x8x4xf32>
    %67 = vector.shape_cast %66 : vector<1x8x4xf32> to vector<8x4xf32>
    %68 = vector.extract_strided_slice %65 {offsets = [1, 0, 0], sizes = [1, 8, 4], strides = [1, 1, 1]} : vector<16x8x4xf32> to vector<1x8x4xf32>
    %69 = vector.shape_cast %68 : vector<1x8x4xf32> to vector<8x4xf32>
    %70 = vector.extract_strided_slice %65 {offsets = [2, 0, 0], sizes = [1, 8, 4], strides = [1, 1, 1]} : vector<16x8x4xf32> to vector<1x8x4xf32>
    %71 = vector.shape_cast %70 : vector<1x8x4xf32> to vector<8x4xf32>
    %72 = vector.extract_strided_slice %65 {offsets = [3, 0, 0], sizes = [1, 8, 4], strides = [1, 1, 1]} : vector<16x8x4xf32> to vector<1x8x4xf32>
    %73 = vector.shape_cast %72 : vector<1x8x4xf32> to vector<8x4xf32>
    %74 = vector.extract_strided_slice %65 {offsets = [4, 0, 0], sizes = [1, 8, 4], strides = [1, 1, 1]} : vector<16x8x4xf32> to vector<1x8x4xf32>
    %75 = vector.shape_cast %74 : vector<1x8x4xf32> to vector<8x4xf32>
    %76 = vector.extract_strided_slice %65 {offsets = [5, 0, 0], sizes = [1, 8, 4], strides = [1, 1, 1]} : vector<16x8x4xf32> to vector<1x8x4xf32>
    %77 = vector.shape_cast %76 : vector<1x8x4xf32> to vector<8x4xf32>
    %78 = vector.extract_strided_slice %65 {offsets = [6, 0, 0], sizes = [1, 8, 4], strides = [1, 1, 1]} : vector<16x8x4xf32> to vector<1x8x4xf32>
    %79 = vector.shape_cast %78 : vector<1x8x4xf32> to vector<8x4xf32>
    %80 = vector.extract_strided_slice %65 {offsets = [7, 0, 0], sizes = [1, 8, 4], strides = [1, 1, 1]} : vector<16x8x4xf32> to vector<1x8x4xf32>
    %81 = vector.shape_cast %80 : vector<1x8x4xf32> to vector<8x4xf32>
    %82 = tpu.concatenate %67, %69, %71, %73, %75, %77, %79, %81 in 1 : vector<8x4xf32>, vector<8x4xf32>, vector<8x4xf32>, vector<8x4xf32>, vector<8x4xf32>, vector<8x4xf32>, vector<8x4xf32>, vector<8x4xf32> -> vector<8x32xf32>
    %83 = vector.extract_strided_slice %65 {offsets = [8, 0, 0], sizes = [1, 8, 4], strides = [1, 1, 1]} : vector<16x8x4xf32> to vector<1x8x4xf32>
    %84 = vector.shape_cast %83 : vector<1x8x4xf32> to vector<8x4xf32>
    %85 = vector.extract_strided_slice %65 {offsets = [9, 0, 0], sizes = [1, 8, 4], strides = [1, 1, 1]} : vector<16x8x4xf32> to vector<1x8x4xf32>
    %86 = vector.shape_cast %85 : vector<1x8x4xf32> to vector<8x4xf32>
    %87 = vector.extract_strided_slice %65 {offsets = [10, 0, 0], sizes = [1, 8, 4], strides = [1, 1, 1]} : vector<16x8x4xf32> to vector<1x8x4xf32>
    %88 = vector.shape_cast %87 : vector<1x8x4xf32> to vector<8x4xf32>
    %89 = vector.extract_strided_slice %65 {offsets = [11, 0, 0], sizes = [1, 8, 4], strides = [1, 1, 1]} : vector<16x8x4xf32> to vector<1x8x4xf32>
    %90 = vector.shape_cast %89 : vector<1x8x4xf32> to vector<8x4xf32>
    %91 = vector.extract_strided_slice %65 {offsets = [12, 0, 0], sizes = [1, 8, 4], strides = [1, 1, 1]} : vector<16x8x4xf32> to vector<1x8x4xf32>
    %92 = vector.shape_cast %91 : vector<1x8x4xf32> to vector<8x4xf32>
    %93 = vector.extract_strided_slice %65 {offsets = [13, 0, 0], sizes = [1, 8, 4], strides = [1, 1, 1]} : vector<16x8x4xf32> to vector<1x8x4xf32>
    %94 = vector.shape_cast %93 : vector<1x8x4xf32> to vector<8x4xf32>
    %95 = vector.extract_strided_slice %65 {offsets = [14, 0, 0], sizes = [1, 8, 4], strides = [1, 1, 1]} : vector<16x8x4xf32> to vector<1x8x4xf32>
    %96 = vector.shape_cast %95 : vector<1x8x4xf32> to vector<8x4xf32>
    %97 = vector.extract_strided_slice %65 {offsets = [15, 0, 0], sizes = [1, 8, 4], strides = [1, 1, 1]} : vector<16x8x4xf32> to vector<1x8x4xf32>
    %98 = vector.shape_cast %97 : vector<1x8x4xf32> to vector<8x4xf32>
    %99 = tpu.concatenate %84, %86, %88, %90, %92, %94, %96, %98 in 1 : vector<8x4xf32>, vector<8x4xf32>, vector<8x4xf32>, vector<8x4xf32>, vector<8x4xf32>, vector<8x4xf32>, vector<8x4xf32>, vector<8x4xf32> -> vector<8x32xf32>
    %100 = tpu.concatenate %82, %99 in 0 : vector<8x32xf32>, vector<8x32xf32> -> vector<16x32xf32>
    %101 = arith.truncf %100 : vector<16x32xf32> to vector<16x32xbf16>
    %c0_16 = arith.constant 0 : index
    %c0_17 = arith.constant 0 : index
    %102 = vector.load %arg3[%c0_16, %c0_17] : memref<32x32xbf16, #tpu.memory_space<vmem>>, vector<32x32xbf16>
    %cst_18 = arith.constant dense<0.000000e+00> : vector<16x32xf32>
    %103 = tpu.matmul %101, %102, %cst_18 {dimension_numbers = #tpu.dot_dimension_numbers<[1], [0], [0], [1], [0, 0, 1, 1], [], []>} : vector<16x32xbf16>, vector<32x32xbf16>, vector<16x32xf32> -> vector<16x32xf32>
    %104 = vector.broadcast %3 : vector<1x32xf32> to vector<16x32xf32>
    %105 = arith.addf %103, %104 : vector<16x32xf32>
    %106 = arith.addf %0, %105 : vector<16x32xf32>
    %cst_19 = arith.constant dense<0.000000e+00> : vector<16xf32>
    %107 = vector.multi_reduction <add>, %106, %cst_19 [1] : vector<16x32xf32> to vector<16xf32>
    %108 = vector.shape_cast %107 : vector<16xf32> to vector<16x1xf32>
    %cst_20 = arith.constant 3.200000e+01 : f32
    %109 = vector.broadcast %cst_20 : f32 to vector<16x1xf32>
    %110 = arith.divf %108, %109 : vector<16x1xf32>
    %111 = vector.broadcast %110 : vector<16x1xf32> to vector<16x32xf32>
    %112 = arith.subf %106, %111 : vector<16x32xf32>
    %113 = arith.mulf %112, %112 : vector<16x32xf32>
    %cst_21 = arith.constant dense<0.000000e+00> : vector<16xf32>
    %114 = vector.multi_reduction <add>, %113, %cst_21 [1] : vector<16x32xf32> to vector<16xf32>
    %115 = vector.shape_cast %114 : vector<16xf32> to vector<16x1xf32>
    %cst_22 = arith.constant 3.200000e+01 : f32
    %116 = vector.broadcast %cst_22 : f32 to vector<16x1xf32>
    %117 = arith.divf %115, %116 : vector<16x1xf32>
    %118 = vector.broadcast %110 : vector<16x1xf32> to vector<16x32xf32>
    %119 = arith.subf %106, %118 : vector<16x32xf32>
    %cst_23 = arith.constant 9.99999974E-6 : f32
    %120 = vector.broadcast %cst_23 : f32 to vector<16x1xf32>
    %121 = arith.addf %117, %120 : vector<16x1xf32>
    %122 = math.rsqrt %121 : vector<16x1xf32>
    %123 = vector.broadcast %122 : vector<16x1xf32> to vector<16x32xf32>
    %124 = arith.mulf %119, %123 : vector<16x32xf32>
    %125 = vector.broadcast %4 : vector<1x32xf32> to vector<16x32xf32>
    %126 = arith.mulf %124, %125 : vector<16x32xf32>
    %127 = vector.broadcast %5 : vector<1x32xf32> to vector<16x32xf32>
    %128 = arith.addf %126, %127 : vector<16x32xf32>
    %129 = arith.truncf %128 : vector<16x32xf32> to vector<16x32xbf16>
    %c0_24 = arith.constant 0 : index
    %c0_25 = arith.constant 0 : index
    %130 = vector.load %arg4[%c0_24, %c0_25] : memref<32x128xbf16, #tpu.memory_space<vmem>>, vector<32x128xbf16>
    %cst_26 = arith.constant dense<0.000000e+00> : vector<16x128xf32>
    %131 = tpu.matmul %129, %130, %cst_26 {dimension_numbers = #tpu.dot_dimension_numbers<[1], [0], [0], [1], [0, 0, 1, 1], [], []>} : vector<16x32xbf16>, vector<32x128xbf16>, vector<16x128xf32> -> vector<16x128xf32>
    %132 = vector.broadcast %6 : vector<1x128xf32> to vector<16x128xf32>
    %133 = arith.addf %131, %132 : vector<16x128xf32>
    %cst_27 = arith.constant 5.000000e-01 : f32
    %134 = vector.broadcast %cst_27 : f32 to vector<16x128xf32>
    %135 = arith.mulf %134, %133 : vector<16x128xf32>
    %cst_28 = arith.constant 0.707106769 : f32
    %136 = vector.broadcast %cst_28 : f32 to vector<16x128xf32>
    %137 = arith.mulf %133, %136 : vector<16x128xf32>
    %138 = math.erf %137 : vector<16x128xf32>
    %cst_29 = arith.constant 1.000000e+00 : f32
    %139 = vector.broadcast %cst_29 : f32 to vector<16x128xf32>
    %140 = arith.addf %139, %138 : vector<16x128xf32>
    %141 = arith.mulf %135, %140 : vector<16x128xf32>
    %142 = arith.truncf %141 : vector<16x128xf32> to vector<16x128xbf16>
    %c0_30 = arith.constant 0 : index
    %c0_31 = arith.constant 0 : index
    %143 = vector.load %arg5[%c0_30, %c0_31] : memref<128x32xbf16, #tpu.memory_space<vmem>>, vector<128x32xbf16>
    %cst_32 = arith.constant dense<0.000000e+00> : vector<16x32xf32>
    %144 = tpu.matmul %142, %143, %cst_32 {dimension_numbers = #tpu.dot_dimension_numbers<[1], [0], [0], [1], [0, 0, 1, 1], [], []>} : vector<16x128xbf16>, vector<128x32xbf16>, vector<16x32xf32> -> vector<16x32xf32>
    %145 = vector.broadcast %7 : vector<1x32xf32> to vector<16x32xf32>
    %146 = arith.addf %144, %145 : vector<16x32xf32>
    %147 = arith.addf %128, %146 : vector<16x32xf32>
    %cst_33 = arith.constant dense<0.000000e+00> : vector<16xf32>
    %148 = vector.multi_reduction <add>, %147, %cst_33 [1] : vector<16x32xf32> to vector<16xf32>
    %149 = vector.shape_cast %148 : vector<16xf32> to vector<16x1xf32>
    %cst_34 = arith.constant 3.200000e+01 : f32
    %150 = vector.broadcast %cst_34 : f32 to vector<16x1xf32>
    %151 = arith.divf %149, %150 : vector<16x1xf32>
    %152 = vector.broadcast %151 : vector<16x1xf32> to vector<16x32xf32>
    %153 = arith.subf %147, %152 : vector<16x32xf32>
    %154 = arith.mulf %153, %153 : vector<16x32xf32>
    %cst_35 = arith.constant dense<0.000000e+00> : vector<16xf32>
    %155 = vector.multi_reduction <add>, %154, %cst_35 [1] : vector<16x32xf32> to vector<16xf32>
    %156 = vector.shape_cast %155 : vector<16xf32> to vector<16x1xf32>
    %cst_36 = arith.constant 3.200000e+01 : f32
    %157 = vector.broadcast %cst_36 : f32 to vector<16x1xf32>
    %158 = arith.divf %156, %157 : vector<16x1xf32>
    %159 = vector.broadcast %151 : vector<16x1xf32> to vector<16x32xf32>
    %160 = arith.subf %147, %159 : vector<16x32xf32>
    %cst_37 = arith.constant 9.99999974E-6 : f32
    %161 = vector.broadcast %cst_37 : f32 to vector<16x1xf32>
    %162 = arith.addf %158, %161 : vector<16x1xf32>
    %163 = math.rsqrt %162 : vector<16x1xf32>
    %164 = vector.broadcast %163 : vector<16x1xf32> to vector<16x32xf32>
    %165 = arith.mulf %160, %164 : vector<16x32xf32>
    %166 = vector.broadcast %8 : vector<1x32xf32> to vector<16x32xf32>
    %167 = arith.mulf %165, %166 : vector<16x32xf32>
    %168 = vector.broadcast %9 : vector<1x32xf32> to vector<16x32xf32>
    %169 = arith.addf %167, %168 : vector<16x32xf32>
    %c0_38 = arith.constant 0 : index
    %c0_39 = arith.constant 0 : index
    %170 = vector.load %arg7[%c0_38, %c0_39] : memref<16x32xf32, #tpu.memory_space<vmem>>, vector<16x32xf32>
    tpu.vector_store %arg7[%c0_38, %c0_39], %169 {strides = array<i32>} : memref<16x32xf32, #tpu.memory_space<vmem>>, vector<16x32xf32>,
    return
  }
  func.func @transform_0(%arg0: i32) -> (i32, i32) {
    %c0_i32 = arith.constant 0 : i32
    %c0_i32_0 = arith.constant 0 : i32
    %c0_i32_1 = arith.constant 0 : i32
    return %c0_i32, %c0_i32_0 : i32, i32
  }
  func.func @transform_1(%arg0: i32) -> (i32, i32) {
    %c0_i32 = arith.constant 0 : i32
    %c0_i32_0 = arith.constant 0 : i32
    %c0_i32_1 = arith.constant 0 : i32
    return %c0_i32, %c0_i32_0 : i32, i32
  }
  func.func @transform_2(%arg0: i32) -> (i32, i32) {
    %c0_i32 = arith.constant 0 : i32
    %c0_i32_0 = arith.constant 0 : i32
    %c0_i32_1 = arith.constant 0 : i32
    return %c0_i32, %c0_i32_0 : i32, i32
  }
  func.func @transform_3(%arg0: i32) -> (i32, i32) {
    %c0_i32 = arith.constant 0 : i32
    %c0_i32_0 = arith.constant 0 : i32
    %c0_i32_1 = arith.constant 0 : i32
    return %c0_i32, %c0_i32_0 : i32, i32
  }
  func.func @transform_4(%arg0: i32) -> (i32, i32) {
    %c0_i32 = arith.constant 0 : i32
    %c0_i32_0 = arith.constant 0 : i32
    %c0_i32_1 = arith.constant 0 : i32
    return %c0_i32, %c0_i32_0 : i32, i32
  }
  func.func @transform_5(%arg0: i32) -> (i32, i32) {
    %c0_i32 = arith.constant 0 : i32
    %c0_i32_0 = arith.constant 0 : i32
    %c0_i32_1 = arith.constant 0 : i32
    return %c0_i32, %c0_i32_0 : i32, i32
  }
  func.func @transform_6(%arg0: i32) -> (i32, i32) {
    %c0_i32 = arith.constant 0 : i32
    %c0_i32_0 = arith.constant 0 : i32
    %c0_i32_1 = arith.constant 0 : i32
    return %c0_i32, %c0_i32_0 : i32, i32
  }
}

</mosaic_0001>

<llo_original>
// kernel: tpu_custom_call.1
$region0: #{tpu_custom_call.1}
  #allocation0 [shape = 'u32[]', space=smem, size = 0x4, offset = 0x4, fixed_abs, tag = 'smem constant byte address 0x4 - core index']
  #allocation1 [shape = 'u32[144,128]{1,0:T(1,128)}', space=vmem, size = 0x12000, scoped, tag = 'internal scratch']
  %s0 = inlined_call_operand.vmem [shape: f32[16,32], index: 0, kind: input, shape index: {}]
  %s1 = inlined_call_operand.vmem [shape: bf16[32,96], index: 1, kind: input, shape index: {}]
  %s2 = inlined_call_operand.vmem [shape: bf16[32,32], index: 2, kind: input, shape index: {}]
  %s3 = inlined_call_operand.vmem [shape: bf16[32,128], index: 3, kind: input, shape index: {}]
  %s4 = inlined_call_operand.vmem [shape: bf16[128,32], index: 4, kind: input, shape index: {}]
  %s5 = inlined_call_operand.vmem [shape: f32[8,128], index: 5, kind: input, shape index: {}]
  %s6 = inlined_call_operand.hbm [shape: f32[16,32], index: 6, kind: output, shape index: {}]
  %s7 = sld [smem:[#allocation0]]
  $region34: #{tpu_custom_call.1} parent=0
    _
  %s9 = ssub.s32 1, %s7
  %s10 = scalar_select 0, %s9, %s7
  $region1: #{tpu_custom_call.1} parent=0
    #allocation2 [shape = 'u8[8192]{0}', space=vmem, size = 0x2000, scoped, tag = 'output window, operand 0, single buffered']
    #allocation3 [shape = 's32[1]{0}', space=sflag, size = 0x4, scoped, tag = 'scoped memory for tpu_custom_call.1']
    %11 = vsyncpa [#allocation3], 0
    // Predicated region
    $region2: #{tpu_custom_call.1} parent=1 // pred_check
      _
    $region3: #{tpu_custom_call.1} parent=1 // pred_check_branch
      %13 = sbr.rel (0) target = $region5
    $region4: #{tpu_custom_call.1} parent=1 // pred_region
      _
    $region5: #{tpu_custom_call.1} parent=1 // pred_fallthru
      _
    // Predicated region
    $region6: #{tpu_custom_call.1} parent=1 // pred_check
      _
    $region7: #{tpu_custom_call.1} parent=1 // pred_check_branch
      %15 = sbr.rel (0) target = $region9
    $region8: #{tpu_custom_call.1} parent=1 // pred_region
      _
    $region9: #{tpu_custom_call.1} parent=1 // pred_fallthru
      _
    // Predicated region
    $region10: #{tpu_custom_call.1} parent=1 // pred_check
      _
    $region11: #{tpu_custom_call.1} parent=1 // pred_check_branch
      %17 = sbr.rel (0) target = $region13
    $region12: #{tpu_custom_call.1} parent=1 // pred_region
      _
    $region13: #{tpu_custom_call.1} parent=1 // pred_fallthru
      _
    // Predicated region
    $region14: #{tpu_custom_call.1} parent=1 // pred_check
      _
    $region15: #{tpu_custom_call.1} parent=1 // pred_check_branch
      %19 = sbr.rel (0) target = $region17
    $region16: #{tpu_custom_call.1} parent=1 // pred_region
      _
    $region17: #{tpu_custom_call.1} parent=1 // pred_fallthru
      _
    // Predicated region
    $region18: #{tpu_custom_call.1} parent=1 // pred_check
      _
    $region19: #{tpu_custom_call.1} parent=1 // pred_check_branch
      %21 = sbr.rel (0) target = $region21
    $region20: #{tpu_custom_call.1} parent=1 // pred_region
      _
    $region21: #{tpu_custom_call.1} parent=1 // pred_fallthru
      _
    // Predicated region
    $region22: #{tpu_custom_call.1} parent=1 // pred_check
      _
    $region23: #{tpu_custom_call.1} parent=1 // pred_check_branch
      %23 = sbr.rel (0) target = $region25
    $region24: #{tpu_custom_call.1} parent=1 // pred_region
      _
    $region25: #{tpu_custom_call.1} parent=1 // pred_fallthru
      _
    %v25 = vld [vmem:[%s0] sm:$0xff]
    %v26 = vld [vmem:[%s0 + $0x8] sm:$0xff]
    %v27 = vpack.c.bf16 %v26, %v25
    %v28 = vld [vmem:[%s5] sm:$0x1]
    %v29 = vld [vmem:[%s5 + $0x1] sm:$0x1]
    %v30 = vld [vmem:[%s5 + $0x2] sm:$0x1]
    %v31 = vld [vmem:[%s5 + $0x3] sm:$0x1]
    %v32 = vld [vmem:[%s5 + $0x4] sm:$0x1]
    %v33 = vld [vmem:[%s5 + $0x5] sm:$0x1]
    %v34 = vld [vmem:[%s5 + $0x6] sm:$0x1]
    %v35 = vld [vmem:[%s5 + $0x7] sm:$0x1]
    %v36 = vld [vmem:[%s1] sm:$0xf]
    %v37 = vld [vmem:[%s1 + $0x4] sm:$0xf]
    %v38 = vld [vmem:[%s1 + $0x8] sm:$0xf]
    %v39 = vld [vmem:[%s1 + $0xc] sm:$0xf]
    %v40 = vlaneseq
    %v41 = vshrl.u32 %v40, 7
    %v42 = vsub.s32 0, %v41
    %v43 = vrot.slane %v28, %v42
    %v48 = vunpack.c.l.b16 %v36
    %v49 = vunpack.c.l.b16 %v37
    %v50 = vunpack.c.l.b16 %v38
    %v51 = vunpack.c.l.b16 %v39
    %v52 = vpack.c.b16 %v49, %v48
    %v53 = vpack.c.b16 %v51, %v50
    %vm56 = vcmask 261120
    %v58 = vsel %vm56, %v27, 0
    %60 = vmatprep.subr.bf16.mxu0 0
    %61 = vmatpush1.bf16.msra.mxu0 0
    %62 = vmatprep.subr.bf16.mxu0 0
    %63 = vmatpush1.bf16.msra.mxu0 0
    %64 = vmatprep.subr.bf16.mxu0 0
    %65 = vmatpush1.bf16.msra.mxu0 0
    %66 = vmatprep.subr.bf16.mxu0 0
    %67 = vmatpush1.bf16.msra.mxu0 0
    %68 = vmatprep.subr.bf16.mxu0 0
    %69 = vmatpush1.bf16.msra.mxu0 0
    %70 = vmatprep.subr.bf16.mxu0 0
    %71 = vmatpush1.bf16.msra.mxu0 0
    %72 = vmatprep.subr.bf16.mxu0 0
    %73 = vmatpush1.bf16.msra.mxu0 %v53
    %74 = vmatprep.subr.bf16.mxu0 0
    %75 = vmatpush1.bf16.msra.mxu0 %v52
    %76 = vmatprep.subr.bf16.mxu0 0
    %77 = vmatpush2.bf16.msra.mxu0 0
    %78 = vmatprep.subr.bf16.mxu0 0
    %79 = vmatpush2.bf16.msra.mxu0 0
    %80 = vmatprep.subr.bf16.mxu0 0
    %81 = vmatpush2.bf16.msra.mxu0 0
    %82 = vmatprep.subr.bf16.mxu0 0
    %83 = vmatpush2.bf16.msra.mxu0 0
    %84 = vmatprep.subr.bf16.mxu0 0
    %85 = vmatpush2.bf16.msra.mxu0 0
    %86 = vmatprep.subr.bf16.mxu0 0
    %87 = vmatpush2.bf16.msra.mxu0 0
    %88 = vmatprep.subr.bf16.mxu0 0
    %89 = vmatpush2.bf16.msra.mxu0 0
    %90 = vmatprep.subr.bf16.mxu0 0
    %91 = vmatpush2.bf16.msra.mxu0 0
    %92 = vmatprep.mubr.bf16.mxu0 0
    %93 = vmatmul.mubr.bf16.gmra.mxu0 %v58
    %v94 = vpop.f32.mrf.mxu0
    %v95 = vadd.f32 %v43, %v94
    %v96 = vpop.f32.mrf.mxu0
    %v97 = vpop.f32.mrf.mxu0
    %v98 = vadd.f32 %v43, %v97
    %v99 = vpop.f32.mrf.mxu0
    %100 = vdwg.mxu0
    %102 = vrot.lane.b32.xlu0 %v95, 116
    %v103 = vpop.permute.xlu0 %102
    %105 = vrot.lane.b32.xlu0 %v95, 104
    %v106 = vpop.permute.xlu0 %105
    %108 = vrot.lane.b32.xlu0 %v95, 92
    %v109 = vpop.permute.xlu0 %108
    %111 = vrot.lane.b32.xlu0 %v95, 80
    %v112 = vpop.permute.xlu0 %111
    %114 = vrot.lane.b32.xlu0 %v95, 68
    %v115 = vpop.permute.xlu0 %114
    %117 = vrot.lane.b32.xlu0 %v95, 56
    %v118 = vpop.permute.xlu0 %117
    %120 = vrot.lane.b32.xlu0 %v95, 44
    %v121 = vpop.permute.xlu0 %120
    %124 = vrot.lane.b32.xlu0 %v98, 116
    %v125 = vpop.permute.xlu0 %124
    %127 = vrot.lane.b32.xlu0 %v98, 104
    %v128 = vpop.permute.xlu0 %127
    %130 = vrot.lane.b32.xlu0 %v98, 92
    %v131 = vpop.permute.xlu0 %130
    %133 = vrot.lane.b32.xlu0 %v98, 80
    %v134 = vpop.permute.xlu0 %133
    %136 = vrot.lane.b32.xlu0 %v98, 68
    %v137 = vpop.permute.xlu0 %136
    %139 = vrot.lane.b32.xlu0 %v98, 56
    %v140 = vpop.permute.xlu0 %139
    %142 = vrot.lane.b32.xlu0 %v98, 44
    %v143 = vpop.permute.xlu0 %142
    %v145 = vpack.c.bf16 %v95, %v95
    %v146 = vpack.c.bf16 %v103, %v103
    %v147 = vpack.c.bf16 %v106, %v106
    %v148 = vpack.c.bf16 %v109, %v109
    %v149 = vpack.c.bf16 %v112, %v112
    %v150 = vpack.c.bf16 %v115, %v115
    %v151 = vpack.c.bf16 %v118, %v118
    %v152 = vpack.c.bf16 %v121, %v121
    %v153 = vpack.c.bf16 %v98, %v98
    %v154 = vpack.c.bf16 %v125, %v125
    %v155 = vpack.c.bf16 %v128, %v128
    %v156 = vpack.c.bf16 %v131, %v131
    %v157 = vpack.c.bf16 %v134, %v134
    %v158 = vpack.c.bf16 %v137, %v137
    %v159 = vpack.c.bf16 %v140, %v140
    %v160 = vpack.c.bf16 %v143, %v143
    %162 = vrot.lane.b32.xlu0 %v145, 124
    %v163 = vpop.permute.xlu0 %162
    %vm164 = vcmask 31744
    %v166 = vsel %vm164, %v145, 0
    %v169 = vsel %vm164, %v163, 0
    %171 = vmatprep.subr.bf16.mxu0 0
    %172 = vmatpush1.bf16.xpose.msra.mxu0 0
    %173 = vmatprep.subr.bf16.mxu0 0
    %174 = vmatpush1.bf16.xpose.msra.mxu0 0
    %175 = vmatprep.subr.bf16.mxu0 0
    %176 = vmatpush1.bf16.xpose.msra.mxu0 0
    %177 = vmatprep.subr.bf16.mxu0 0
    %178 = vmatpush1.bf16.xpose.msra.mxu0 0
    %179 = vmatprep.subr.bf16.mxu0 0
    %180 = vmatpush1.bf16.xpose.msra.mxu0 0
    %181 = vmatprep.subr.bf16.mxu0 0
    %182 = vmatpush1.bf16.xpose.msra.mxu0 0
    %183 = vmatprep.subr.bf16.mxu0 0
    %184 = vmatpush1.bf16.xpose.msra.mxu0 0
    %185 = vmatprep.subr.bf16.mxu0 0
    %186 = vmatpush1.bf16.xpose.msra.mxu0 %v169
    %187 = vmatprep.subr.bf16.mxu0 0
    %188 = vmatpush2.bf16.xpose.msra.mxu0 0
    %189 = vmatprep.subr.bf16.mxu0 0
    %190 = vmatpush2.bf16.xpose.msra.mxu0 0
    %191 = vmatprep.subr.bf16.mxu0 0
    %192 = vmatpush2.bf16.xpose.msra.mxu0 0
    %193 = vmatprep.subr.bf16.mxu0 0
    %194 = vmatpush2.bf16.xpose.msra.mxu0 0
    %195 = vmatprep.subr.bf16.mxu0 0
    %196 = vmatpush2.bf16.xpose.msra.mxu0 0
    %197 = vmatprep.subr.bf16.mxu0 0
    %198 = vmatpush2.bf16.xpose.msra.mxu0 0
    %199 = vmatprep.subr.bf16.mxu0 0
    %200 = vmatpush2.bf16.xpose.msra.mxu0 0
    %201 = vmatprep.subr.bf16.mxu0 0
    %202 = vmatpush2.bf16.xpose.msra.mxu0 0
    %203 = vmatprep.mubr.bf16.mxu0 0
    %204 = vmatmul.mubr.bf16.gmra.mxu0 %v166
    %v205 = vpop.f32.mrf.mxu0
    %v206 = vadd.f32 0.0, %v205
    %v207 = vpop.f32.mrf.mxu0
    %v208 = vpop.f32.mrf.mxu0
    %v209 = vpop.f32.mrf.mxu0
    %210 = vdwg.mxu0
    %212 = vrot.lane.b32.xlu0 %v146, 124
    %v213 = vpop.permute.xlu0 %212
    %v215 = vsel %vm164, %v146, 0
    %v218 = vsel %vm164, %v213, 0
    %220 = vmatprep.subr.bf16.mxu0 0
    %221 = vmatpush1.bf16.xpose.msra.mxu0 0
    %222 = vmatprep.subr.bf16.mxu0 0
    %223 = vmatpush1.bf16.xpose.msra.mxu0 0
    %224 = vmatprep.subr.bf16.mxu0 0
    %225 = vmatpush1.bf16.xpose.msra.mxu0 0
    %226 = vmatprep.subr.bf16.mxu0 0
    %227 = vmatpush1.bf16.xpose.msra.mxu0 0
    %228 = vmatprep.subr.bf16.mxu0 0
    %229 = vmatpush1.bf16.xpose.msra.mxu0 0
    %230 = vmatprep.subr.bf16.mxu0 0
    %231 = vmatpush1.bf16.xpose.msra.mxu0 0
    %232 = vmatprep.subr.bf16.mxu0 0
    %233 = vmatpush1.bf16.xpose.msra.mxu0 0
    %234 = vmatprep.subr.bf16.mxu0 0
    %235 = vmatpush1.bf16.xpose.msra.mxu0 %v218
    %236 = vmatprep.subr.bf16.mxu0 0
    %237 = vmatpush2.bf16.xpose.msra.mxu0 0
    %238 = vmatprep.subr.bf16.mxu0 0
    %239 = vmatpush2.bf16.xpose.msra.mxu0 0
    %240 = vmatprep.subr.bf16.mxu0 0
    %241 = vmatpush2.bf16.xpose.msra.mxu0 0
    %242 = vmatprep.subr.bf16.mxu0 0
    %243 = vmatpush2.bf16.xpose.msra.mxu0 0
    %244 = vmatprep.subr.bf16.mxu0 0
    %245 = vmatpush2.bf16.xpose.msra.mxu0 0
    %246 = vmatprep.subr.bf16.mxu0 0
    %247 = vmatpush2.bf16.xpose.msra.mxu0 0
    %248 = vmatprep.subr.bf16.mxu0 0
    %249 = vmatpush2.bf16.xpose.msra.mxu0 0
    %250 = vmatprep.subr.bf16.mxu0 0
    %251 = vmatpush2.bf16.xpose.msra.mxu0 0
    %252 = vmatprep.mubr.bf16.mxu0 0
    %253 = vmatmul.mubr.bf16.gmra.mxu0 %v215
    %v254 = vpop.f32.mrf.mxu0
    %v255 = vadd.f32 0.0, %v254
    %v256 = vpop.f32.mrf.mxu0
    %v257 = vpop.f32.mrf.mxu0
    %v258 = vpop.f32.mrf.mxu0
    %259 = vdwg.mxu0
    %261 = vrot.lane.b32.xlu0 %v147, 124
    %v262 = vpop.permute.xlu0 %261
    %v264 = vsel %vm164, %v147, 0
    %v267 = vsel %vm164, %v262, 0
    %269 = vmatprep.subr.bf16.mxu0 0
    %270 = vmatpush1.bf16.xpose.msra.mxu0 0
    %271 = vmatprep.subr.bf16.mxu0 0
    %272 = vmatpush1.bf16.xpose.msra.mxu0 0
    %273 = vmatprep.subr.bf16.mxu0 0
    %274 = vmatpush1.bf16.xpose.msra.mxu0 0
    %275 = vmatprep.subr.bf16.mxu0 0
    %276 = vmatpush1.bf16.xpose.msra.mxu0 0
    %277 = vmatprep.subr.bf16.mxu0 0
    %278 = vmatpush1.bf16.xpose.msra.mxu0 0
    %279 = vmatprep.subr.bf16.mxu0 0
    %280 = vmatpush1.bf16.xpose.msra.mxu0 0
    %281 = vmatprep.subr.bf16.mxu0 0
    %282 = vmatpush1.bf16.xpose.msra.mxu0 0
    %283 = vmatprep.subr.bf16.mxu0 0
    %284 = vmatpush1.bf16.xpose.msra.mxu0 %v267
    %285 = vmatprep.subr.bf16.mxu0 0
    %286 = vmatpush2.bf16.xpose.msra.mxu0 0
    %287 = vmatprep.subr.bf16.mxu0 0
    %288 = vmatpush2.bf16.xpose.msra.mxu0 0
    %289 = vmatprep.subr.bf16.mxu0 0
    %290 = vmatpush2.bf16.xpose.msra.mxu0 0
    %291 = vmatprep.subr.bf16.mxu0 0
    %292 = vmatpush2.bf16.xpose.msra.mxu0 0
    %293 = vmatprep.subr.bf16.mxu0 0
    %294 = vmatpush2.bf16.xpose.msra.mxu0 0
    %295 = vmatprep.subr.bf16.mxu0 0
    %296 = vmatpush2.bf16.xpose.msra.mxu0 0
    %297 = vmatprep.subr.bf16.mxu0 0
    %298 = vmatpush2.bf16.xpose.msra.mxu0 0
    %299 = vmatprep.subr.bf16.mxu0 0
    %300 = vmatpush2.bf16.xpose.msra.mxu0 0
    %301 = vmatprep.mubr.bf16.mxu0 0
    %302 = vmatmul.mubr.bf16.gmra.mxu0 %v264
    %v303 = vpop.f32.mrf.mxu0
    %v304 = vadd.f32 0.0, %v303
    %v305 = vpop.f32.mrf.mxu0
    %v306 = vpop.f32.mrf.mxu0
    %v307 = vpop.f32.mrf.mxu0
    %308 = vdwg.mxu0
    %310 = vrot.lane.b32.xlu0 %v148, 124
    %v311 = vpop.permute.xlu0 %310
    %v313 = vsel %vm164, %v148, 0
    %v316 = vsel %vm164, %v311, 0
    %318 = vmatprep.subr.bf16.mxu0 0
    %319 = vmatpush1.bf16.xpose.msra.mxu0 0
    %320 = vmatprep.subr.bf16.mxu0 0
    %321 = vmatpush1.bf16.xpose.msra.mxu0 0
    %322 = vmatprep.subr.bf16.mxu0 0
    %323 = vmatpush1.bf16.xpose.msra.mxu0 0
    %324 = vmatprep.subr.bf16.mxu0 0
    %325 = vmatpush1.bf16.xpose.msra.mxu0 0
    %326 = vmatprep.subr.bf16.mxu0 0
    %327 = vmatpush1.bf16.xpose.msra.mxu0 0
    %328 = vmatprep.subr.bf16.mxu0 0
    %329 = vmatpush1.bf16.xpose.msra.mxu0 0
    %330 = vmatprep.subr.bf16.mxu0 0
    %331 = vmatpush1.bf16.xpose.msra.mxu0 0
    %332 = vmatprep.subr.bf16.mxu0 0
    %333 = vmatpush1.bf16.xpose.msra.mxu0 %v316
    %334 = vmatprep.subr.bf16.mxu0 0
    %335 = vmatpush2.bf16.xpose.msra.mxu0 0
    %336 = vmatprep.subr.bf16.mxu0 0
    %337 = vmatpush2.bf16.xpose.msra.mxu0 0
    %338 = vmatprep.subr.bf16.mxu0 0
    %339 = vmatpush2.bf16.xpose.msra.mxu0 0
    %340 = vmatprep.subr.bf16.mxu0 0
    %341 = vmatpush2.bf16.xpose.msra.mxu0 0
    %342 = vmatprep.subr.bf16.mxu0 0
    %343 = vmatpush2.bf16.xpose.msra.mxu0 0
    %344 = vmatprep.subr.bf16.mxu0 0
    %345 = vmatpush2.bf16.xpose.msra.mxu0 0
    %346 = vmatprep.subr.bf16.mxu0 0
    %347 = vmatpush2.bf16.xpose.msra.mxu0 0
    %348 = vmatprep.subr.bf16.mxu0 0
    %349 = vmatpush2.bf16.xpose.msra.mxu0 0
    %350 = vmatprep.mubr.bf16.mxu0 0
    %351 = vmatmul.mubr.bf16.gmra.mxu0 %v313
    %v352 = vpop.f32.mrf.mxu0
    %v353 = vadd.f32 0.0, %v352
    %v354 = vpop.f32.mrf.mxu0
    %v355 = vpop.f32.mrf.mxu0
    %v356 = vpop.f32.mrf.mxu0
    %357 = vdwg.mxu0
    %359 = vrot.lane.b32.xlu0 %v149, 124
    %v360 = vpop.permute.xlu0 %359
    %v362 = vsel %vm164, %v149, 0
    %v365 = vsel %vm164, %v360, 0
    %367 = vmatprep.subr.bf16.mxu0 0
    %368 = vmatpush1.bf16.xpose.msra.mxu0 0
    %369 = vmatprep.subr.bf16.mxu0 0
    %370 = vmatpush1.bf16.xpose.msra.mxu0 0
    %371 = vmatprep.subr.bf16.mxu0 0
    %372 = vmatpush1.bf16.xpose.msra.mxu0 0
    %373 = vmatprep.subr.bf16.mxu0 0
    %374 = vmatpush1.bf16.xpose.msra.mxu0 0
    %375 = vmatprep.subr.bf16.mxu0 0
    %376 = vmatpush1.bf16.xpose.msra.mxu0 0
    %377 = vmatprep.subr.bf16.mxu0 0
    %378 = vmatpush1.bf16.xpose.msra.mxu0 0
    %379 = vmatprep.subr.bf16.mxu0 0
    %380 = vmatpush1.bf16.xpose.msra.mxu0 0
    %381 = vmatprep.subr.bf16.mxu0 0
    %382 = vmatpush1.bf16.xpose.msra.mxu0 %v365
    %383 = vmatprep.subr.bf16.mxu0 0
    %384 = vmatpush2.bf16.xpose.msra.mxu0 0
    %385 = vmatprep.subr.bf16.mxu0 0
    %386 = vmatpush2.bf16.xpose.msra.mxu0 0
    %387 = vmatprep.subr.bf16.mxu0 0
    %388 = vmatpush2.bf16.xpose.msra.mxu0 0
    %389 = vmatprep.subr.bf16.mxu0 0
    %390 = vmatpush2.bf16.xpose.msra.mxu0 0
    %391 = vmatprep.subr.bf16.mxu0 0
    %392 = vmatpush2.bf16.xpose.msra.mxu0 0
    %393 = vmatprep.subr.bf16.mxu0 0
    %394 = vmatpush2.bf16.xpose.msra.mxu0 0
    %395 = vmatprep.subr.bf16.mxu0 0
    %396 = vmatpush2.bf16.xpose.msra.mxu0 0
    %397 = vmatprep.subr.bf16.mxu0 0
    %398 = vmatpush2.bf16.xpose.msra.mxu0 0
    %399 = vmatprep.mubr.bf16.mxu0 0
    %400 = vmatmul.mubr.bf16.gmra.mxu0 %v362
    %v401 = vpop.f32.mrf.mxu0
    %v402 = vadd.f32 0.0, %v401
    %v403 = vpop.f32.mrf.mxu0
    %v404 = vpop.f32.mrf.mxu0
    %v405 = vpop.f32.mrf.mxu0
    %406 = vdwg.mxu0
    %408 = vrot.lane.b32.xlu0 %v150, 124
    %v409 = vpop.permute.xlu0 %408
    %v411 = vsel %vm164, %v150, 0
    %v414 = vsel %vm164, %v409, 0
    %416 = vmatprep.subr.bf16.mxu0 0
    %417 = vmatpush1.bf16.xpose.msra.mxu0 0
    %418 = vmatprep.subr.bf16.mxu0 0
    %419 = vmatpush1.bf16.xpose.msra.mxu0 0
    %420 = vmatprep.subr.bf16.mxu0 0
    %421 = vmatpush1.bf16.xpose.msra.mxu0 0
    %422 = vmatprep.subr.bf16.mxu0 0
    %423 = vmatpush1.bf16.xpose.msra.mxu0 0
    %424 = vmatprep.subr.bf16.mxu0 0
    %425 = vmatpush1.bf16.xpose.msra.mxu0 0
    %426 = vmatprep.subr.bf16.mxu0 0
    %427 = vmatpush1.bf16.xpose.msra.mxu0 0
    %428 = vmatprep.subr.bf16.mxu0 0
    %429 = vmatpush1.bf16.xpose.msra.mxu0 0
    %430 = vmatprep.subr.bf16.mxu0 0
    %431 = vmatpush1.bf16.xpose.msra.mxu0 %v414
    %432 = vmatprep.subr.bf16.mxu0 0
    %433 = vmatpush2.bf16.xpose.msra.mxu0 0
    %434 = vmatprep.subr.bf16.mxu0 0
    %435 = vmatpush2.bf16.xpose.msra.mxu0 0
    %436 = vmatprep.subr.bf16.mxu0 0
    %437 = vmatpush2.bf16.xpose.msra.mxu0 0
    %438 = vmatprep.subr.bf16.mxu0 0
    %439 = vmatpush2.bf16.xpose.msra.mxu0 0
    %440 = vmatprep.subr.bf16.mxu0 0
    %441 = vmatpush2.bf16.xpose.msra.mxu0 0
    %442 = vmatprep.subr.bf16.mxu0 0
    %443 = vmatpush2.bf16.xpose.msra.mxu0 0
    %444 = vmatprep.subr.bf16.mxu0 0
    %445 = vmatpush2.bf16.xpose.msra.mxu0 0
    %446 = vmatprep.subr.bf16.mxu0 0
    %447 = vmatpush2.bf16.xpose.msra.mxu0 0
    %448 = vmatprep.mubr.bf16.mxu0 0
    %449 = vmatmul.mubr.bf16.gmra.mxu0 %v411
    %v450 = vpop.f32.mrf.mxu0
    %v451 = vadd.f32 0.0, %v450
    %v452 = vpop.f32.mrf.mxu0
    %v453 = vpop.f32.mrf.mxu0
    %v454 = vpop.f32.mrf.mxu0
    %455 = vdwg.mxu0
    %457 = vrot.lane.b32.xlu0 %v151, 124
    %v458 = vpop.permute.xlu0 %457
    %v460 = vsel %vm164, %v151, 0
    %v463 = vsel %vm164, %v458, 0
    %465 = vmatprep.subr.bf16.mxu0 0
    %466 = vmatpush1.bf16.xpose.msra.mxu0 0
    %467 = vmatprep.subr.bf16.mxu0 0
    %468 = vmatpush1.bf16.xpose.msra.mxu0 0
    %469 = vmatprep.subr.bf16.mxu0 0
    %470 = vmatpush1.bf16.xpose.msra.mxu0 0
    %471 = vmatprep.subr.bf16.mxu0 0
    %472 = vmatpush1.bf16.xpose.msra.mxu0 0
    %473 = vmatprep.subr.bf16.mxu0 0
    %474 = vmatpush1.bf16.xpose.msra.mxu0 0
    %475 = vmatprep.subr.bf16.mxu0 0
    %476 = vmatpush1.bf16.xpose.msra.mxu0 0
    %477 = vmatprep.subr.bf16.mxu0 0
    %478 = vmatpush1.bf16.xpose.msra.mxu0 0
    %479 = vmatprep.subr.bf16.mxu0 0
    %480 = vmatpush1.bf16.xpose.msra.mxu0 %v463
    %481 = vmatprep.subr.bf16.mxu0 0
    %482 = vmatpush2.bf16.xpose.msra.mxu0 0
    %483 = vmatprep.subr.bf16.mxu0 0
    %484 = vmatpush2.bf16.xpose.msra.mxu0 0
    %485 = vmatprep.subr.bf16.mxu0 0
    %486 = vmatpush2.bf16.xpose.msra.mxu0 0
    %487 = vmatprep.subr.bf16.mxu0 0
    %488 = vmatpush2.bf16.xpose.msra.mxu0 0
    %489 = vmatprep.subr.bf16.mxu0 0
    %490 = vmatpush2.bf16.xpose.msra.mxu0 0
    %491 = vmatprep.subr.bf16.mxu0 0
    %492 = vmatpush2.bf16.xpose.msra.mxu0 0
    %493 = vmatprep.subr.bf16.mxu0 0
    %494 = vmatpush2.bf16.xpose.msra.mxu0 0
    %495 = vmatprep.subr.bf16.mxu0 0
    %496 = vmatpush2.bf16.xpose.msra.mxu0 0
    %497 = vmatprep.mubr.bf16.mxu0 0
    %498 = vmatmul.mubr.bf16.gmra.mxu0 %v460
    %v499 = vpop.f32.mrf.mxu0
    %v500 = vadd.f32 0.0, %v499
    %v501 = vpop.f32.mrf.mxu0
    %v502 = vpop.f32.mrf.mxu0
    %v503 = vpop.f32.mrf.mxu0
    %504 = vdwg.mxu0
    %506 = vrot.lane.b32.xlu0 %v152, 124
    %v507 = vpop.permute.xlu0 %506
    %v509 = vsel %vm164, %v152, 0
    %v512 = vsel %vm164, %v507, 0
    %514 = vmatprep.subr.bf16.mxu0 0
    %515 = vmatpush1.bf16.xpose.msra.mxu0 0
    %516 = vmatprep.subr.bf16.mxu0 0
    %517 = vmatpush1.bf16.xpose.msra.mxu0 0
    %518 = vmatprep.subr.bf16.mxu0 0
    %519 = vmatpush1.bf16.xpose.msra.mxu0 0
    %520 = vmatprep.subr.bf16.mxu0 0
    %521 = vmatpush1.bf16.xpose.msra.mxu0 0
    %522 = vmatprep.subr.bf16.mxu0 0
    %523 = vmatpush1.bf16.xpose.msra.mxu0 0
    %524 = vmatprep.subr.bf16.mxu0 0
    %525 = vmatpush1.bf16.xpose.msra.mxu0 0
    %526 = vmatprep.subr.bf16.mxu0 0
    %527 = vmatpush1.bf16.xpose.msra.mxu0 0
    %528 = vmatprep.subr.bf16.mxu0 0
    %529 = vmatpush1.bf16.xpose.msra.mxu0 %v512
    %530 = vmatprep.subr.bf16.mxu0 0
    %531 = vmatpush2.bf16.xpose.msra.mxu0 0
    %532 = vmatprep.subr.bf16.mxu0 0
    %533 = vmatpush2.bf16.xpose.msra.mxu0 0
    %534 = vmatprep.subr.bf16.mxu0 0
    %535 = vmatpush2.bf16.xpose.msra.mxu0 0
    %536 = vmatprep.subr.bf16.mxu0 0
    %537 = vmatpush2.bf16.xpose.msra.mxu0 0
    %538 = vmatprep.subr.bf16.mxu0 0
    %539 = vmatpush2.bf16.xpose.msra.mxu0 0
    %540 = vmatprep.subr.bf16.mxu0 0
    %541 = vmatpush2.bf16.xpose.msra.mxu0 0
    %542 = vmatprep.subr.bf16.mxu0 0
    %543 = vmatpush2.bf16.xpose.msra.mxu0 0
    %544 = vmatprep.subr.bf16.mxu0 0
    %545 = vmatpush2.bf16.xpose.msra.mxu0 0
    %546 = vmatprep.mubr.bf16.mxu0 0
    %547 = vmatmul.mubr.bf16.gmra.mxu0 %v509
    %v548 = vpop.f32.mrf.mxu0
    %v549 = vadd.f32 0.0, %v548
    %v550 = vpop.f32.mrf.mxu0
    %v551 = vpop.f32.mrf.mxu0
    %v552 = vpop.f32.mrf.mxu0
    %553 = vdwg.mxu0
    %555 = vrot.lane.b32.xlu0 %v153, 124
    %v556 = vpop.permute.xlu0 %555
    %v558 = vsel %vm164, %v153, 0
    %v561 = vsel %vm164, %v556, 0
    %563 = vmatprep.subr.bf16.mxu0 0
    %564 = vmatpush1.bf16.xpose.msra.mxu0 0
    %565 = vmatprep.subr.bf16.mxu0 0
    %566 = vmatpush1.bf16.xpose.msra.mxu0 0
    %567 = vmatprep.subr.bf16.mxu0 0
    %568 = vmatpush1.bf16.xpose.msra.mxu0 0
    %569 = vmatprep.subr.bf16.mxu0 0
    %570 = vmatpush1.bf16.xpose.msra.mxu0 0
    %571 = vmatprep.subr.bf16.mxu0 0
    %572 = vmatpush1.bf16.xpose.msra.mxu0 0
    %573 = vmatprep.subr.bf16.mxu0 0
    %574 = vmatpush1.bf16.xpose.msra.mxu0 0
    %575 = vmatprep.subr.bf16.mxu0 0
    %576 = vmatpush1.bf16.xpose.msra.mxu0 0
    %577 = vmatprep.subr.bf16.mxu0 0
    %578 = vmatpush1.bf16.xpose.msra.mxu0 %v561
    %579 = vmatprep.subr.bf16.mxu0 0
    %580 = vmatpush2.bf16.xpose.msra.mxu0 0
    %581 = vmatprep.subr.bf16.mxu0 0
    %582 = vmatpush2.bf16.xpose.msra.mxu0 0
    %583 = vmatprep.subr.bf16.mxu0 0
    %584 = vmatpush2.bf16.xpose.msra.mxu0 0
    %585 = vmatprep.subr.bf16.mxu0 0
    %586 = vmatpush2.bf16.xpose.msra.mxu0 0
    %587 = vmatprep.subr.bf16.mxu0 0
    %588 = vmatpush2.bf16.xpose.msra.mxu0 0
    %589 = vmatprep.subr.bf16.mxu0 0
    %590 = vmatpush2.bf16.xpose.msra.mxu0 0
    %591 = vmatprep.subr.bf16.mxu0 0
    %592 = vmatpush2.bf16.xpose.msra.mxu0 0
    %593 = vmatprep.subr.bf16.mxu0 0
    %594 = vmatpush2.bf16.xpose.msra.mxu0 0
    %595 = vmatprep.mubr.bf16.mxu0 0
    %596 = vmatmul.mubr.bf16.gmra.mxu0 %v558
    %v597 = vpop.f32.mrf.mxu0
    %v598 = vadd.f32 0.0, %v597
    %v599 = vpop.f32.mrf.mxu0
    %v600 = vpop.f32.mrf.mxu0
    %v601 = vpop.f32.mrf.mxu0
    %602 = vdwg.mxu0
    %604 = vrot.lane.b32.xlu0 %v154, 124
    %v605 = vpop.permute.xlu0 %604
    %v607 = vsel %vm164, %v154, 0
    %v610 = vsel %vm164, %v605, 0
    %612 = vmatprep.subr.bf16.mxu0 0
    %613 = vmatpush1.bf16.xpose.msra.mxu0 0
    %614 = vmatprep.subr.bf16.mxu0 0
    %615 = vmatpush1.bf16.xpose.msra.mxu0 0
    %616 = vmatprep.subr.bf16.mxu0 0
    %617 = vmatpush1.bf16.xpose.msra.mxu0 0
    %618 = vmatprep.subr.bf16.mxu0 0
    %619 = vmatpush1.bf16.xpose.msra.mxu0 0
    %620 = vmatprep.subr.bf16.mxu0 0
    %621 = vmatpush1.bf16.xpose.msra.mxu0 0
    %622 = vmatprep.subr.bf16.mxu0 0
    %623 = vmatpush1.bf16.xpose.msra.mxu0 0
    %624 = vmatprep.subr.bf16.mxu0 0
    %625 = vmatpush1.bf16.xpose.msra.mxu0 0
    %626 = vmatprep.subr.bf16.mxu0 0
    %627 = vmatpush1.bf16.xpose.msra.mxu0 %v610
    %628 = vmatprep.subr.bf16.mxu0 0
    %629 = vmatpush2.bf16.xpose.msra.mxu0 0
    %630 = vmatprep.subr.bf16.mxu0 0
    %631 = vmatpush2.bf16.xpose.msra.mxu0 0
    %632 = vmatprep.subr.bf16.mxu0 0
    %633 = vmatpush2.bf16.xpose.msra.mxu0 0
    %634 = vmatprep.subr.bf16.mxu0 0
    %635 = vmatpush2.bf16.xpose.msra.mxu0 0
    %636 = vmatprep.subr.bf16.mxu0 0
    %637 = vmatpush2.bf16.xpose.msra.mxu0 0
    %638 = vmatprep.subr.bf16.mxu0 0
    %639 = vmatpush2.bf16.xpose.msra.mxu0 0
    %640 = vmatprep.subr.bf16.mxu0 0
    %641 = vmatpush2.bf16.xpose.msra.mxu0 0
    %642 = vmatprep.subr.bf16.mxu0 0
    %643 = vmatpush2.bf16.xpose.msra.mxu0 0
    %644 = vmatprep.mubr.bf16.mxu0 0
    %645 = vmatmul.mubr.bf16.gmra.mxu0 %v607
    %v646 = vpop.f32.mrf.mxu0
    %v647 = vadd.f32 0.0, %v646
    %v648 = vpop.f32.mrf.mxu0
    %v649 = vpop.f32.mrf.mxu0
    %v650 = vpop.f32.mrf.mxu0
    %651 = vdwg.mxu0
    %653 = vrot.lane.b32.xlu0 %v155, 124
    %v654 = vpop.permute.xlu0 %653
    %v656 = vsel %vm164, %v155, 0
    %v659 = vsel %vm164, %v654, 0
    %661 = vmatprep.subr.bf16.mxu0 0
    %662 = vmatpush1.bf16.xpose.msra.mxu0 0
    %663 = vmatprep.subr.bf16.mxu0 0
    %664 = vmatpush1.bf16.xpose.msra.mxu0 0
    %665 = vmatprep.subr.bf16.mxu0 0
    %666 = vmatpush1.bf16.xpose.msra.mxu0 0
    %667 = vmatprep.subr.bf16.mxu0 0
    %668 = vmatpush1.bf16.xpose.msra.mxu0 0
    %669 = vmatprep.subr.bf16.mxu0 0
    %670 = vmatpush1.bf16.xpose.msra.mxu0 0
    %671 = vmatprep.subr.bf16.mxu0 0
    %672 = vmatpush1.bf16.xpose.msra.mxu0 0
    %673 = vmatprep.subr.bf16.mxu0 0
    %674 = vmatpush1.bf16.xpose.msra.mxu0 0
    %675 = vmatprep.subr.bf16.mxu0 0
    %676 = vmatpush1.bf16.xpose.msra.mxu0 %v659
    %677 = vmatprep.subr.bf16.mxu0 0
    %678 = vmatpush2.bf16.xpose.msra.mxu0 0
    %679 = vmatprep.subr.bf16.mxu0 0
    %680 = vmatpush2.bf16.xpose.msra.mxu0 0
    %681 = vmatprep.subr.bf16.mxu0 0
    %682 = vmatpush2.bf16.xpose.msra.mxu0 0
    %683 = vmatprep.subr.bf16.mxu0 0
    %684 = vmatpush2.bf16.xpose.msra.mxu0 0
    %685 = vmatprep.subr.bf16.mxu0 0
    %686 = vmatpush2.bf16.xpose.msra.mxu0 0
    %687 = vmatprep.subr.bf16.mxu0 0
    %688 = vmatpush2.bf16.xpose.msra.mxu0 0
    %689 = vmatprep.subr.bf16.mxu0 0
    %690 = vmatpush2.bf16.xpose.msra.mxu0 0
    %691 = vmatprep.subr.bf16.mxu0 0
    %692 = vmatpush2.bf16.xpose.msra.mxu0 0
    %693 = vmatprep.mubr.bf16.mxu0 0
    %694 = vmatmul.mubr.bf16.gmra.mxu0 %v656
    %v695 = vpop.f32.mrf.mxu0
    %v696 = vadd.f32 0.0, %v695
    %v697 = vpop.f32.mrf.mxu0
    %v698 = vpop.f32.mrf.mxu0
    %v699 = vpop.f32.mrf.mxu0
    %700 = vdwg.mxu0
    %702 = vrot.lane.b32.xlu0 %v156, 124
    %v703 = vpop.permute.xlu0 %702
    %v705 = vsel %vm164, %v156, 0
    %v708 = vsel %vm164, %v703, 0
    %710 = vmatprep.subr.bf16.mxu0 0
    %711 = vmatpush1.bf16.xpose.msra.mxu0 0
    %712 = vmatprep.subr.bf16.mxu0 0
    %713 = vmatpush1.bf16.xpose.msra.mxu0 0
    %714 = vmatprep.subr.bf16.mxu0 0
    %715 = vmatpush1.bf16.xpose.msra.mxu0 0
    %716 = vmatprep.subr.bf16.mxu0 0
    %717 = vmatpush1.bf16.xpose.msra.mxu0 0
    %718 = vmatprep.subr.bf16.mxu0 0
    %719 = vmatpush1.bf16.xpose.msra.mxu0 0
    %720 = vmatprep.subr.bf16.mxu0 0
    %721 = vmatpush1.bf16.xpose.msra.mxu0 0
    %722 = vmatprep.subr.bf16.mxu0 0
    %723 = vmatpush1.bf16.xpose.msra.mxu0 0
    %724 = vmatprep.subr.bf16.mxu0 0
    %725 = vmatpush1.bf16.xpose.msra.mxu0 %v708
    %726 = vmatprep.subr.bf16.mxu0 0
    %727 = vmatpush2.bf16.xpose.msra.mxu0 0
    %728 = vmatprep.subr.bf16.mxu0 0
    %729 = vmatpush2.bf16.xpose.msra.mxu0 0
    %730 = vmatprep.subr.bf16.mxu0 0
    %731 = vmatpush2.bf16.xpose.msra.mxu0 0
    %732 = vmatprep.subr.bf16.mxu0 0
    %733 = vmatpush2.bf16.xpose.msra.mxu0 0
    %734 = vmatprep.subr.bf16.mxu0 0
    %735 = vmatpush2.bf16.xpose.msra.mxu0 0
    %736 = vmatprep.subr.bf16.mxu0 0
    %737 = vmatpush2.bf16.xpose.msra.mxu0 0
    %738 = vmatprep.subr.bf16.mxu0 0
    %739 = vmatpush2.bf16.xpose.msra.mxu0 0
    %740 = vmatprep.subr.bf16.mxu0 0
    %741 = vmatpush2.bf16.xpose.msra.mxu0 0
    %742 = vmatprep.mubr.bf16.mxu0 0
    %743 = vmatmul.mubr.bf16.gmra.mxu0 %v705
    %v744 = vpop.f32.mrf.mxu0
    %v745 = vadd.f32 0.0, %v744
    %v746 = vpop.f32.mrf.mxu0
    %v747 = vpop.f32.mrf.mxu0
    %v748 = vpop.f32.mrf.mxu0
    %749 = vdwg.mxu0
    %751 = vrot.lane.b32.xlu0 %v157, 124
    %v752 = vpop.permute.xlu0 %751
    %v754 = vsel %vm164, %v157, 0
    %v757 = vsel %vm164, %v752, 0
    %759 = vmatprep.subr.bf16.mxu0 0
    %760 = vmatpush1.bf16.xpose.msra.mxu0 0
    %761 = vmatprep.subr.bf16.mxu0 0
    %762 = vmatpush1.bf16.xpose.msra.mxu0 0
    %763 = vmatprep.subr.bf16.mxu0 0
    %764 = vmatpush1.bf16.xpose.msra.mxu0 0
    %765 = vmatprep.subr.bf16.mxu0 0
    %766 = vmatpush1.bf16.xpose.msra.mxu0 0
    %767 = vmatprep.subr.bf16.mxu0 0
    %768 = vmatpush1.bf16.xpose.msra.mxu0 0
    %769 = vmatprep.subr.bf16.mxu0 0
    %770 = vmatpush1.bf16.xpose.msra.mxu0 0
    %771 = vmatprep.subr.bf16.mxu0 0
    %772 = vmatpush1.bf16.xpose.msra.mxu0 0
    %773 = vmatprep.subr.bf16.mxu0 0
    %774 = vmatpush1.bf16.xpose.msra.mxu0 %v757
    %775 = vmatprep.subr.bf16.mxu0 0
    %776 = vmatpush2.bf16.xpose.msra.mxu0 0
    %777 = vmatprep.subr.bf16.mxu0 0
    %778 = vmatpush2.bf16.xpose.msra.mxu0 0
    %779 = vmatprep.subr.bf16.mxu0 0
    %780 = vmatpush2.bf16.xpose.msra.mxu0 0
    %781 = vmatprep.subr.bf16.mxu0 0
    %782 = vmatpush2.bf16.xpose.msra.mxu0 0
    %783 = vmatprep.subr.bf16.mxu0 0
    %784 = vmatpush2.bf16.xpose.msra.mxu0 0
    %785 = vmatprep.subr.bf16.mxu0 0
    %786 = vmatpush2.bf16.xpose.msra.mxu0 0
    %787 = vmatprep.subr.bf16.mxu0 0
    %788 = vmatpush2.bf16.xpose.msra.mxu0 0
    %789 = vmatprep.subr.bf16.mxu0 0
    %790 = vmatpush2.bf16.xpose.msra.mxu0 0
    %791 = vmatprep.mubr.bf16.mxu0 0
    %792 = vmatmul.mubr.bf16.gmra.mxu0 %v754
    %v793 = vpop.f32.mrf.mxu0
    %v794 = vadd.f32 0.0, %v793
    %v795 = vpop.f32.mrf.mxu0
    %v796 = vpop.f32.mrf.mxu0
    %v797 = vpop.f32.mrf.mxu0
    %798 = vdwg.mxu0
    %800 = vrot.lane.b32.xlu0 %v158, 124
    %v801 = vpop.permute.xlu0 %800
    %v803 = vsel %vm164, %v158, 0
    %v806 = vsel %vm164, %v801, 0
    %808 = vmatprep.subr.bf16.mxu0 0
    %809 = vmatpush1.bf16.xpose.msra.mxu0 0
    %810 = vmatprep.subr.bf16.mxu0 0
    %811 = vmatpush1.bf16.xpose.msra.mxu0 0
    %812 = vmatprep.subr.bf16.mxu0 0
    %813 = vmatpush1.bf16.xpose.msra.mxu0 0
    %814 = vmatprep.subr.bf16.mxu0 0
    %815 = vmatpush1.bf16.xpose.msra.mxu0 0
    %816 = vmatprep.subr.bf16.mxu0 0
    %817 = vmatpush1.bf16.xpose.msra.mxu0 0
    %818 = vmatprep.subr.bf16.mxu0 0
    %819 = vmatpush1.bf16.xpose.msra.mxu0 0
    %820 = vmatprep.subr.bf16.mxu0 0
    %821 = vmatpush1.bf16.xpose.msra.mxu0 0
    %822 = vmatprep.subr.bf16.mxu0 0
    %823 = vmatpush1.bf16.xpose.msra.mxu0 %v806
    %824 = vmatprep.subr.bf16.mxu0 0
    %825 = vmatpush2.bf16.xpose.msra.mxu0 0
    %826 = vmatprep.subr.bf16.mxu0 0
    %827 = vmatpush2.bf16.xpose.msra.mxu0 0
    %828 = vmatprep.subr.bf16.mxu0 0
    %829 = vmatpush2.bf16.xpose.msra.mxu0 0
    %830 = vmatprep.subr.bf16.mxu0 0
    %831 = vmatpush2.bf16.xpose.msra.mxu0 0
    %832 = vmatprep.subr.bf16.mxu0 0
    %833 = vmatpush2.bf16.xpose.msra.mxu0 0
    %834 = vmatprep.subr.bf16.mxu0 0
    %835 = vmatpush2.bf16.xpose.msra.mxu0 0
    %836 = vmatprep.subr.bf16.mxu0 0
    %837 = vmatpush2.bf16.xpose.msra.mxu0 0
    %838 = vmatprep.subr.bf16.mxu0 0
    %839 = vmatpush2.bf16.xpose.msra.mxu0 0
    %840 = vmatprep.mubr.bf16.mxu0 0
    %841 = vmatmul.mubr.bf16.gmra.mxu0 %v803
    %v842 = vpop.f32.mrf.mxu0
    %v843 = vadd.f32 0.0, %v842
    %v844 = vpop.f32.mrf.mxu0
    %v845 = vpop.f32.mrf.mxu0
    %v846 = vpop.f32.mrf.mxu0
    %847 = vdwg.mxu0
    %849 = vrot.lane.b32.xlu0 %v159, 124
    %v850 = vpop.permute.xlu0 %849
    %v852 = vsel %vm164, %v159, 0
    %v855 = vsel %vm164, %v850, 0
    %857 = vmatprep.subr.bf16.mxu0 0
    %858 = vmatpush1.bf16.xpose.msra.mxu0 0
    %859 = vmatprep.subr.bf16.mxu0 0
    %860 = vmatpush1.bf16.xpose.msra.mxu0 0
    %861 = vmatprep.subr.bf16.mxu0 0
    %862 = vmatpush1.bf16.xpose.msra.mxu0 0
    %863 = vmatprep.subr.bf16.mxu0 0
    %864 = vmatpush1.bf16.xpose.msra.mxu0 0
    %865 = vmatprep.subr.bf16.mxu0 0
    %866 = vmatpush1.bf16.xpose.msra.mxu0 0
    %867 = vmatprep.subr.bf16.mxu0 0
    %868 = vmatpush1.bf16.xpose.msra.mxu0 0
    %869 = vmatprep.subr.bf16.mxu0 0
    %870 = vmatpush1.bf16.xpose.msra.mxu0 0
    %871 = vmatprep.subr.bf16.mxu0 0
    %872 = vmatpush1.bf16.xpose.msra.mxu0 %v855
    %873 = vmatprep.subr.bf16.mxu0 0
    %874 = vmatpush2.bf16.xpose.msra.mxu0 0
    %875 = vmatprep.subr.bf16.mxu0 0
    %876 = vmatpush2.bf16.xpose.msra.mxu0 0
    %877 = vmatprep.subr.bf16.mxu0 0
    %878 = vmatpush2.bf16.xpose.msra.mxu0 0
    %879 = vmatprep.subr.bf16.mxu0 0
    %880 = vmatpush2.bf16.xpose.msra.mxu0 0
    %881 = vmatprep.subr.bf16.mxu0 0
    %882 = vmatpush2.bf16.xpose.msra.mxu0 0
    %883 = vmatprep.subr.bf16.mxu0 0
    %884 = vmatpush2.bf16.xpose.msra.mxu0 0
    %885 = vmatprep.subr.bf16.mxu0 0
    %886 = vmatpush2.bf16.xpose.msra.mxu0 0
    %887 = vmatprep.subr.bf16.mxu0 0
    %888 = vmatpush2.bf16.xpose.msra.mxu0 0
    %889 = vmatprep.mubr.bf16.mxu0 0
    %890 = vmatmul.mubr.bf16.gmra.mxu0 %v852
    %v891 = vpop.f32.mrf.mxu0
    %v892 = vadd.f32 0.0, %v891
    %v893 = vpop.f32.mrf.mxu0
    %v894 = vpop.f32.mrf.mxu0
    %v895 = vpop.f32.mrf.mxu0
    %896 = vdwg.mxu0
    %898 = vrot.lane.b32.xlu0 %v160, 124
    %v899 = vpop.permute.xlu0 %898
    %v901 = vsel %vm164, %v160, 0
    %v904 = vsel %vm164, %v899, 0
    %906 = vmatprep.subr.bf16.mxu0 0
    %907 = vmatpush1.bf16.xpose.msra.mxu0 0
    %908 = vmatprep.subr.bf16.mxu0 0
    %909 = vmatpush1.bf16.xpose.msra.mxu0 0
    %910 = vmatprep.subr.bf16.mxu0 0
    %911 = vmatpush1.bf16.xpose.msra.mxu0 0
    %912 = vmatprep.subr.bf16.mxu0 0
    %913 = vmatpush1.bf16.xpose.msra.mxu0 0
    %914 = vmatprep.subr.bf16.mxu0 0
    %915 = vmatpush1.bf16.xpose.msra.mxu0 0
    %916 = vmatprep.subr.bf16.mxu0 0
    %917 = vmatpush1.bf16.xpose.msra.mxu0 0
    %918 = vmatprep.subr.bf16.mxu0 0
    %919 = vmatpush1.bf16.xpose.msra.mxu0 0
    %920 = vmatprep.subr.bf16.mxu0 0
    %921 = vmatpush1.bf16.xpose.msra.mxu0 %v904
    %922 = vmatprep.subr.bf16.mxu0 0
    %923 = vmatpush2.bf16.xpose.msra.mxu0 0
    %924 = vmatprep.subr.bf16.mxu0 0
    %925 = vmatpush2.bf16.xpose.msra.mxu0 0
    %926 = vmatprep.subr.bf16.mxu0 0
    %927 = vmatpush2.bf16.xpose.msra.mxu0 0
    %928 = vmatprep.subr.bf16.mxu0 0
    %929 = vmatpush2.bf16.xpose.msra.mxu0 0
    %930 = vmatprep.subr.bf16.mxu0 0
    %931 = vmatpush2.bf16.xpose.msra.mxu0 0
    %932 = vmatprep.subr.bf16.mxu0 0
    %933 = vmatpush2.bf16.xpose.msra.mxu0 0
    %934 = vmatprep.subr.bf16.mxu0 0
    %935 = vmatpush2.bf16.xpose.msra.mxu0 0
    %936 = vmatprep.subr.bf16.mxu0 0
    %937 = vmatpush2.bf16.xpose.msra.mxu0 0
    %938 = vmatprep.mubr.bf16.mxu0 0
    %939 = vmatmul.mubr.bf16.gmra.mxu0 %v901
    %v940 = vpop.f32.mrf.mxu0
    %v941 = vadd.f32 0.0, %v940
    %v942 = vpop.f32.mrf.mxu0
    %v943 = vpop.f32.mrf.mxu0
    %v944 = vpop.f32.mrf.mxu0
    %945 = vdwg.mxu0
    %vm946 = vcmask 64512
    %v947 = vsel %vm946, %v206, -inf
    %948 = vmax.xlane.f32.xlu0 %v947
    %v949 = vpop.xlane.xlu0 %948
    %v950 = vsel %vm946, %v255, -inf
    %951 = vmax.xlane.f32.xlu0 %v950
    %v952 = vpop.xlane.xlu0 %951
    %v953 = vsel %vm946, %v304, -inf
    %954 = vmax.xlane.f32.xlu0 %v953
    %v955 = vpop.xlane.xlu0 %954
    %v956 = vsel %vm946, %v353, -inf
    %957 = vmax.xlane.f32.xlu0 %v956
    %v958 = vpop.xlane.xlu0 %957
    %v959 = vsel %vm946, %v402, -inf
    %960 = vmax.xlane.f32.xlu0 %v959
    %v961 = vpop.xlane.xlu0 %960
    %v962 = vsel %vm946, %v451, -inf
    %963 = vmax.xlane.f32.xlu0 %v962
    %v964 = vpop.xlane.xlu0 %963
    %v965 = vsel %vm946, %v500, -inf
    %966 = vmax.xlane.f32.xlu0 %v965
    %v967 = vpop.xlane.xlu0 %966
    %v968 = vsel %vm946, %v549, -inf
    %969 = vmax.xlane.f32.xlu0 %v968
    %v970 = vpop.xlane.xlu0 %969
    %v971 = vsel %vm946, %v598, -inf
    %972 = vmax.xlane.f32.xlu0 %v971
    %v973 = vpop.xlane.xlu0 %972
    %v974 = vsel %vm946, %v647, -inf
    %975 = vmax.xlane.f32.xlu0 %v974
    %v976 = vpop.xlane.xlu0 %975
    %v977 = vsel %vm946, %v696, -inf
    %978 = vmax.xlane.f32.xlu0 %v977
    %v979 = vpop.xlane.xlu0 %978
    %v980 = vsel %vm946, %v745, -inf
    %981 = vmax.xlane.f32.xlu0 %v980
    %v982 = vpop.xlane.xlu0 %981
    %v983 = vsel %vm946, %v794, -inf
    %984 = vmax.xlane.f32.xlu0 %v983
    %v985 = vpop.xlane.xlu0 %984
    %v986 = vsel %vm946, %v843, -inf
    %987 = vmax.xlane.f32.xlu0 %v986
    %v988 = vpop.xlane.xlu0 %987
    %v989 = vsel %vm946, %v892, -inf
    %990 = vmax.xlane.f32.xlu0 %v989
    %v991 = vpop.xlane.xlu0 %990
    %v992 = vsel %vm946, %v941, -inf
    %993 = vmax.xlane.f32.xlu0 %v992
    %v994 = vpop.xlane.xlu0 %993
    %v995 = vsub.f32 %v206, %v949
    %v996 = vsub.f32 %v255, %v952
    %v997 = vsub.f32 %v304, %v955
    %v998 = vsub.f32 %v353, %v958
    %v999 = vsub.f32 %v402, %v961
    %v1000 = vsub.f32 %v451, %v964
    %v1001 = vsub.f32 %v500, %v967
    %v1002 = vsub.f32 %v549, %v970
    %v1003 = vsub.f32 %v598, %v973
    %v1004 = vsub.f32 %v647, %v976
    %v1005 = vsub.f32 %v696, %v979
    %v1006 = vsub.f32 %v745, %v982
    %v1007 = vsub.f32 %v794, %v985
    %v1008 = vsub.f32 %v843, %v988
    %v1009 = vsub.f32 %v892, %v991
    %v1010 = vsub.f32 %v941, %v994
    %v1011 = vmul.f32 %v995, 1.442695
    %v1012 = vpow.pop %v1011
    %v1013 = vmul.f32 %v996, 1.442695
    %v1014 = vpow.pop %v1013
    %v1015 = vmul.f32 %v997, 1.442695
    %v1016 = vpow.pop %v1015
    %v1017 = vmul.f32 %v998, 1.442695
    %v1018 = vpow.pop %v1017
    %v1019 = vmul.f32 %v999, 1.442695
    %v1020 = vpow.pop %v1019
    %v1021 = vmul.f32 %v1000, 1.442695
    %v1022 = vpow.pop %v1021
    %v1023 = vmul.f32 %v1001, 1.442695
    %v1024 = vpow.pop %v1023
    %v1025 = vmul.f32 %v1002, 1.442695
    %v1026 = vpow.pop %v1025
    %v1027 = vmul.f32 %v1003, 1.442695
    %v1028 = vpow.pop %v1027
    %v1029 = vmul.f32 %v1004, 1.442695
    %v1030 = vpow.pop %v1029
    %v1031 = vmul.f32 %v1005, 1.442695
    %v1032 = vpow.pop %v1031
    %v1033 = vmul.f32 %v1006, 1.442695
    %v1034 = vpow.pop %v1033
    %v1035 = vmul.f32 %v1007, 1.442695
    %v1036 = vpow.pop %v1035
    %v1037 = vmul.f32 %v1008, 1.442695
    %v1038 = vpow.pop %v1037
    %v1039 = vmul.f32 %v1009, 1.442695
    %v1040 = vpow.pop %v1039
    %v1041 = vmul.f32 %v1010, 1.442695
    %v1042 = vpow.pop %v1041
    %v1043 = vsel %vm946, %v1012, 0.0
    %1044 = vadd.xlane.f32.xlu0 %v1043
    %v1045 = vpop.xlane.xlu0 %1044
    %v1046 = vsel %vm946, %v1014, 0.0
    %1047 = vadd.xlane.f32.xlu0 %v1046
    %v1048 = vpop.xlane.xlu0 %1047
    %v1049 = vsel %vm946, %v1016, 0.0
    %1050 = vadd.xlane.f32.xlu0 %v1049
    %v1051 = vpop.xlane.xlu0 %1050
    %v1052 = vsel %vm946, %v1018, 0.0
    %1053 = vadd.xlane.f32.xlu0 %v1052
    %v1054 = vpop.xlane.xlu0 %1053
    %v1055 = vsel %vm946, %v1020, 0.0
    %1056 = vadd.xlane.f32.xlu0 %v1055
    %v1057 = vpop.xlane.xlu0 %1056
    %v1058 = vsel %vm946, %v1022, 0.0
    %1059 = vadd.xlane.f32.xlu0 %v1058
    %v1060 = vpop.xlane.xlu0 %1059
    %v1061 = vsel %vm946, %v1024, 0.0
    %1062 = vadd.xlane.f32.xlu0 %v1061
    %v1063 = vpop.xlane.xlu0 %1062
    %v1064 = vsel %vm946, %v1026, 0.0
    %1065 = vadd.xlane.f32.xlu0 %v1064
    %v1066 = vpop.xlane.xlu0 %1065
    %v1067 = vsel %vm946, %v1028, 0.0
    %1068 = vadd.xlane.f32.xlu0 %v1067
    %v1069 = vpop.xlane.xlu0 %1068
    %v1070 = vsel %vm946, %v1030, 0.0
    %1071 = vadd.xlane.f32.xlu0 %v1070
    %v1072 = vpop.xlane.xlu0 %1071
    %v1073 = vsel %vm946, %v1032, 0.0
    %1074 = vadd.xlane.f32.xlu0 %v1073
    %v1075 = vpop.xlane.xlu0 %1074
    %v1076 = vsel %vm946, %v1034, 0.0
    %1077 = vadd.xlane.f32.xlu0 %v1076
    %v1078 = vpop.xlane.xlu0 %1077
    %v1079 = vsel %vm946, %v1036, 0.0
    %1080 = vadd.xlane.f32.xlu0 %v1079
    %v1081 = vpop.xlane.xlu0 %1080
    %v1082 = vsel %vm946, %v1038, 0.0
    %1083 = vadd.xlane.f32.xlu0 %v1082
    %v1084 = vpop.xlane.xlu0 %1083
    %v1085 = vsel %vm946, %v1040, 0.0
    %1086 = vadd.xlane.f32.xlu0 %v1085
    %v1087 = vpop.xlane.xlu0 %1086
    %v1088 = vsel %vm946, %v1042, 0.0
    %1089 = vadd.xlane.f32.xlu0 %v1088
    %v1090 = vpop.xlane.xlu0 %1089
    %v1091 = vrcp.pop %v1045
    %v1092 = vrcp.pop %v1048
    %v1093 = vrcp.pop %v1051
    %v1094 = vrcp.pop %v1054
    %v1095 = vrcp.pop %v1057
    %v1096 = vrcp.pop %v1060
    %v1097 = vrcp.pop %v1063
    %v1098 = vrcp.pop %v1066
    %v1099 = vrcp.pop %v1069
    %v1100 = vrcp.pop %v1072
    %v1101 = vrcp.pop %v1075
    %v1102 = vrcp.pop %v1078
    %v1103 = vrcp.pop %v1081
    %v1104 = vrcp.pop %v1084
    %v1105 = vrcp.pop %v1087
    %v1106 = vrcp.pop %v1090
    %v1107 = vmul.f32 %v1012, %v1091
    %v1108 = vmul.f32 %v1014, %v1092
    %v1109 = vmul.f32 %v1016, %v1093
    %v1110 = vmul.f32 %v1018, %v1094
    %v1111 = vmul.f32 %v1020, %v1095
    %v1112 = vmul.f32 %v1022, %v1096
    %v1113 = vmul.f32 %v1024, %v1097
    %v1114 = vmul.f32 %v1026, %v1098
    %v1115 = vmul.f32 %v1028, %v1099
    %v1116 = vmul.f32 %v1030, %v1100
    %v1117 = vmul.f32 %v1032, %v1101
    %v1118 = vmul.f32 %v1034, %v1102
    %v1119 = vmul.f32 %v1036, %v1103
    %v1120 = vmul.f32 %v1038, %v1104
    %v1121 = vmul.f32 %v1040, %v1105
    %v1122 = vmul.f32 %v1042, %v1106
    %v1123 = vpack.c.bf16 %v1107, %v1107
    %v1124 = vpack.c.bf16 %v1108, %v1108
    %v1125 = vpack.c.bf16 %v1109, %v1109
    %v1126 = vpack.c.bf16 %v1110, %v1110
    %v1127 = vpack.c.bf16 %v1111, %v1111
    %v1128 = vpack.c.bf16 %v1112, %v1112
    %v1129 = vpack.c.bf16 %v1113, %v1113
    %v1130 = vpack.c.bf16 %v1114, %v1114
    %v1131 = vpack.c.bf16 %v1115, %v1115
    %v1132 = vpack.c.bf16 %v1116, %v1116
    %v1133 = vpack.c.bf16 %v1117, %v1117
    %v1134 = vpack.c.bf16 %v1118, %v1118
    %v1135 = vpack.c.bf16 %v1119, %v1119
    %v1136 = vpack.c.bf16 %v1120, %v1120
    %v1137 = vpack.c.bf16 %v1121, %v1121
    %v1138 = vpack.c.bf16 %v1122, %v1122
    %1139 = vrot.lane.b32.xlu0 %v145, 120
    %v1140 = vpop.permute.xlu0 %1139
    %v1142 = vsel %vm946, %v1123, 0
    %vm1144 = vcmask 1043456
    %v1146 = vsel %vm1144, %v1140, 0
    %1148 = vmatprep.subr.bf16.mxu0 0
    %1149 = vmatpush1.bf16.msra.mxu0 0
    %1150 = vmatprep.subr.bf16.mxu0 0
    %1151 = vmatpush1.bf16.msra.mxu0 0
    %1152 = vmatprep.subr.bf16.mxu0 0
    %1153 = vmatpush1.bf16.msra.mxu0 0
    %1154 = vmatprep.subr.bf16.mxu0 0
    %1155 = vmatpush1.bf16.msra.mxu0 0
    %1156 = vmatprep.subr.bf16.mxu0 0
    %1157 = vmatpush1.bf16.msra.mxu0 0
    %1158 = vmatprep.subr.bf16.mxu0 0
    %1159 = vmatpush1.bf16.msra.mxu0 0
    %1160 = vmatprep.subr.bf16.mxu0 0
    %1161 = vmatpush1.bf16.msra.mxu0 0
    %1162 = vmatprep.subr.bf16.mxu0 0
    %1163 = vmatpush1.bf16.msra.mxu0 %v1146
    %1164 = vmatprep.subr.bf16.mxu0 0
    %1165 = vmatpush2.bf16.msra.mxu0 0
    %1166 = vmatprep.subr.bf16.mxu0 0
    %1167 = vmatpush2.bf16.msra.mxu0 0
    %1168 = vmatprep.subr.bf16.mxu0 0
    %1169 = vmatpush2.bf16.msra.mxu0 0
    %1170 = vmatprep.subr.bf16.mxu0 0
    %1171 = vmatpush2.bf16.msra.mxu0 0
    %1172 = vmatprep.subr.bf16.mxu0 0
    %1173 = vmatpush2.bf16.msra.mxu0 0
    %1174 = vmatprep.subr.bf16.mxu0 0
    %1175 = vmatpush2.bf16.msra.mxu0 0
    %1176 = vmatprep.subr.bf16.mxu0 0
    %1177 = vmatpush2.bf16.msra.mxu0 0
    %1178 = vmatprep.subr.bf16.mxu0 0
    %1179 = vmatpush2.bf16.msra.mxu0 0
    %1180 = vmatprep.mubr.bf16.mxu0 0
    %1181 = vmatmul.mubr.bf16.gmra.mxu0 %v1142
    %v1182 = vpop.f32.mrf.mxu0
    %v1183 = vadd.f32 0.0, %v1182
    %v1184 = vpop.f32.mrf.mxu0
    %v1185 = vpop.f32.mrf.mxu0
    %v1186 = vpop.f32.mrf.mxu0
    %1187 = vdwg.mxu0
    %1188 = vrot.lane.b32.xlu0 %v146, 120
    %v1189 = vpop.permute.xlu0 %1188
    %v1191 = vsel %vm946, %v1124, 0
    %v1194 = vsel %vm1144, %v1189, 0
    %1196 = vmatprep.subr.bf16.mxu0 0
    %1197 = vmatpush1.bf16.msra.mxu0 0
    %1198 = vmatprep.subr.bf16.mxu0 0
    %1199 = vmatpush1.bf16.msra.mxu0 0
    %1200 = vmatprep.subr.bf16.mxu0 0
    %1201 = vmatpush1.bf16.msra.mxu0 0
    %1202 = vmatprep.subr.bf16.mxu0 0
    %1203 = vmatpush1.bf16.msra.mxu0 0
    %1204 = vmatprep.subr.bf16.mxu0 0
    %1205 = vmatpush1.bf16.msra.mxu0 0
    %1206 = vmatprep.subr.bf16.mxu0 0
    %1207 = vmatpush1.bf16.msra.mxu0 0
    %1208 = vmatprep.subr.bf16.mxu0 0
    %1209 = vmatpush1.bf16.msra.mxu0 0
    %1210 = vmatprep.subr.bf16.mxu0 0
    %1211 = vmatpush1.bf16.msra.mxu0 %v1194
    %1212 = vmatprep.subr.bf16.mxu0 0
    %1213 = vmatpush2.bf16.msra.mxu0 0
    %1214 = vmatprep.subr.bf16.mxu0 0
    %1215 = vmatpush2.bf16.msra.mxu0 0
    %1216 = vmatprep.subr.bf16.mxu0 0
    %1217 = vmatpush2.bf16.msra.mxu0 0
    %1218 = vmatprep.subr.bf16.mxu0 0
    %1219 = vmatpush2.bf16.msra.mxu0 0
    %1220 = vmatprep.subr.bf16.mxu0 0
    %1221 = vmatpush2.bf16.msra.mxu0 0
    %1222 = vmatprep.subr.bf16.mxu0 0
    %1223 = vmatpush2.bf16.msra.mxu0 0
    %1224 = vmatprep.subr.bf16.mxu0 0
    %1225 = vmatpush2.bf16.msra.mxu0 0
    %1226 = vmatprep.subr.bf16.mxu0 0
    %1227 = vmatpush2.bf16.msra.mxu0 0
    %1228 = vmatprep.mubr.bf16.mxu0 0
    %1229 = vmatmul.mubr.bf16.gmra.mxu0 %v1191
    %v1230 = vpop.f32.mrf.mxu0
    %v1231 = vadd.f32 0.0, %v1230
    %v1232 = vpop.f32.mrf.mxu0
    %v1233 = vpop.f32.mrf.mxu0
    %v1234 = vpop.f32.mrf.mxu0
    %1235 = vdwg.mxu0
    %1236 = vrot.lane.b32.xlu0 %v147, 120
    %v1237 = vpop.permute.xlu0 %1236
    %v1239 = vsel %vm946, %v1125, 0
    %v1242 = vsel %vm1144, %v1237, 0
    %1244 = vmatprep.subr.bf16.mxu0 0
    %1245 = vmatpush1.bf16.msra.mxu0 0
    %1246 = vmatprep.subr.bf16.mxu0 0
    %1247 = vmatpush1.bf16.msra.mxu0 0
    %1248 = vmatprep.subr.bf16.mxu0 0
    %1249 = vmatpush1.bf16.msra.mxu0 0
    %1250 = vmatprep.subr.bf16.mxu0 0
    %1251 = vmatpush1.bf16.msra.mxu0 0
    %1252 = vmatprep.subr.bf16.mxu0 0
    %1253 = vmatpush1.bf16.msra.mxu0 0
    %1254 = vmatprep.subr.bf16.mxu0 0
    %1255 = vmatpush1.bf16.msra.mxu0 0
    %1256 = vmatprep.subr.bf16.mxu0 0
    %1257 = vmatpush1.bf16.msra.mxu0 0
    %1258 = vmatprep.subr.bf16.mxu0 0
    %1259 = vmatpush1.bf16.msra.mxu0 %v1242
    %1260 = vmatprep.subr.bf16.mxu0 0
    %1261 = vmatpush2.bf16.msra.mxu0 0
    %1262 = vmatprep.subr.bf16.mxu0 0
    %1263 = vmatpush2.bf16.msra.mxu0 0
    %1264 = vmatprep.subr.bf16.mxu0 0
    %1265 = vmatpush2.bf16.msra.mxu0 0
    %1266 = vmatprep.subr.bf16.mxu0 0
    %1267 = vmatpush2.bf16.msra.mxu0 0
    %1268 = vmatprep.subr.bf16.mxu0 0
    %1269 = vmatpush2.bf16.msra.mxu0 0
    %1270 = vmatprep.subr.bf16.mxu0 0
    %1271 = vmatpush2.bf16.msra.mxu0 0
    %1272 = vmatprep.subr.bf16.mxu0 0
    %1273 = vmatpush2.bf16.msra.mxu0 0
    %1274 = vmatprep.subr.bf16.mxu0 0
    %1275 = vmatpush2.bf16.msra.mxu0 0
    %1276 = vmatprep.mubr.bf16.mxu0 0
    %1277 = vmatmul.mubr.bf16.gmra.mxu0 %v1239
    %v1278 = vpop.f32.mrf.mxu0
    %v1279 = vadd.f32 0.0, %v1278
    %v1280 = vpop.f32.mrf.mxu0
    %v1281 = vpop.f32.mrf.mxu0
    %v1282 = vpop.f32.mrf.mxu0
    %1283 = vdwg.mxu0
    %1284 = vrot.lane.b32.xlu0 %v148, 120
    %v1285 = vpop.permute.xlu0 %1284
    %v1287 = vsel %vm946, %v1126, 0
    %v1290 = vsel %vm1144, %v1285, 0
    %1292 = vmatprep.subr.bf16.mxu0 0
    %1293 = vmatpush1.bf16.msra.mxu0 0
    %1294 = vmatprep.subr.bf16.mxu0 0
    %1295 = vmatpush1.bf16.msra.mxu0 0
    %1296 = vmatprep.subr.bf16.mxu0 0
    %1297 = vmatpush1.bf16.msra.mxu0 0
    %1298 = vmatprep.subr.bf16.mxu0 0
    %1299 = vmatpush1.bf16.msra.mxu0 0
    %1300 = vmatprep.subr.bf16.mxu0 0
    %1301 = vmatpush1.bf16.msra.mxu0 0
    %1302 = vmatprep.subr.bf16.mxu0 0
    %1303 = vmatpush1.bf16.msra.mxu0 0
    %1304 = vmatprep.subr.bf16.mxu0 0
    %1305 = vmatpush1.bf16.msra.mxu0 0
    %1306 = vmatprep.subr.bf16.mxu0 0
    %1307 = vmatpush1.bf16.msra.mxu0 %v1290
    %1308 = vmatprep.subr.bf16.mxu0 0
    %1309 = vmatpush2.bf16.msra.mxu0 0
    %1310 = vmatprep.subr.bf16.mxu0 0
    %1311 = vmatpush2.bf16.msra.mxu0 0
    %1312 = vmatprep.subr.bf16.mxu0 0
    %1313 = vmatpush2.bf16.msra.mxu0 0
    %1314 = vmatprep.subr.bf16.mxu0 0
    %1315 = vmatpush2.bf16.msra.mxu0 0
    %1316 = vmatprep.subr.bf16.mxu0 0
    %1317 = vmatpush2.bf16.msra.mxu0 0
    %1318 = vmatprep.subr.bf16.mxu0 0
    %1319 = vmatpush2.bf16.msra.mxu0 0
    %1320 = vmatprep.subr.bf16.mxu0 0
    %1321 = vmatpush2.bf16.msra.mxu0 0
    %1322 = vmatprep.subr.bf16.mxu0 0
    %1323 = vmatpush2.bf16.msra.mxu0 0
    %1324 = vmatprep.mubr.bf16.mxu0 0
    %1325 = vmatmul.mubr.bf16.gmra.mxu0 %v1287
    %v1326 = vpop.f32.mrf.mxu0
    %v1327 = vadd.f32 0.0, %v1326
    %v1328 = vpop.f32.mrf.mxu0
    %v1329 = vpop.f32.mrf.mxu0
    %v1330 = vpop.f32.mrf.mxu0
    %1331 = vdwg.mxu0
    %1332 = vrot.lane.b32.xlu0 %v149, 120
    %v1333 = vpop.permute.xlu0 %1332
    %v1335 = vsel %vm946, %v1127, 0
    %v1338 = vsel %vm1144, %v1333, 0
    %1340 = vmatprep.subr.bf16.mxu0 0
    %1341 = vmatpush1.bf16.msra.mxu0 0
    %1342 = vmatprep.subr.bf16.mxu0 0
    %1343 = vmatpush1.bf16.msra.mxu0 0
    %1344 = vmatprep.subr.bf16.mxu0 0
    %1345 = vmatpush1.bf16.msra.mxu0 0
    %1346 = vmatprep.subr.bf16.mxu0 0
    %1347 = vmatpush1.bf16.msra.mxu0 0
    %1348 = vmatprep.subr.bf16.mxu0 0
    %1349 = vmatpush1.bf16.msra.mxu0 0
    %1350 = vmatprep.subr.bf16.mxu0 0
    %1351 = vmatpush1.bf16.msra.mxu0 0
    %1352 = vmatprep.subr.bf16.mxu0 0
    %1353 = vmatpush1.bf16.msra.mxu0 0
    %1354 = vmatprep.subr.bf16.mxu0 0
    %1355 = vmatpush1.bf16.msra.mxu0 %v1338
    %1356 = vmatprep.subr.bf16.mxu0 0
    %1357 = vmatpush2.bf16.msra.mxu0 0
    %1358 = vmatprep.subr.bf16.mxu0 0
    %1359 = vmatpush2.bf16.msra.mxu0 0
    %1360 = vmatprep.subr.bf16.mxu0 0
    %1361 = vmatpush2.bf16.msra.mxu0 0
    %1362 = vmatprep.subr.bf16.mxu0 0
    %1363 = vmatpush2.bf16.msra.mxu0 0
    %1364 = vmatprep.subr.bf16.mxu0 0
    %1365 = vmatpush2.bf16.msra.mxu0 0
    %1366 = vmatprep.subr.bf16.mxu0 0
    %1367 = vmatpush2.bf16.msra.mxu0 0
    %1368 = vmatprep.subr.bf16.mxu0 0
    %1369 = vmatpush2.bf16.msra.mxu0 0
    %1370 = vmatprep.subr.bf16.mxu0 0
    %1371 = vmatpush2.bf16.msra.mxu0 0
    %1372 = vmatprep.mubr.bf16.mxu0 0
    %1373 = vmatmul.mubr.bf16.gmra.mxu0 %v1335
    %v1374 = vpop.f32.mrf.mxu0
    %v1375 = vadd.f32 0.0, %v1374
    %v1376 = vpop.f32.mrf.mxu0
    %v1377 = vpop.f32.mrf.mxu0
    %v1378 = vpop.f32.mrf.mxu0
    %1379 = vdwg.mxu0
    %1380 = vrot.lane.b32.xlu0 %v150, 120
    %v1381 = vpop.permute.xlu0 %1380
    %v1383 = vsel %vm946, %v1128, 0
    %v1386 = vsel %vm1144, %v1381, 0
    %1388 = vmatprep.subr.bf16.mxu0 0
    %1389 = vmatpush1.bf16.msra.mxu0 0
    %1390 = vmatprep.subr.bf16.mxu0 0
    %1391 = vmatpush1.bf16.msra.mxu0 0
    %1392 = vmatprep.subr.bf16.mxu0 0
    %1393 = vmatpush1.bf16.msra.mxu0 0
    %1394 = vmatprep.subr.bf16.mxu0 0
    %1395 = vmatpush1.bf16.msra.mxu0 0
    %1396 = vmatprep.subr.bf16.mxu0 0
    %1397 = vmatpush1.bf16.msra.mxu0 0
    %1398 = vmatprep.subr.bf16.mxu0 0
    %1399 = vmatpush1.bf16.msra.mxu0 0
    %1400 = vmatprep.subr.bf16.mxu0 0
    %1401 = vmatpush1.bf16.msra.mxu0 0
    %1402 = vmatprep.subr.bf16.mxu0 0
    %1403 = vmatpush1.bf16.msra.mxu0 %v1386
    %1404 = vmatprep.subr.bf16.mxu0 0
    %1405 = vmatpush2.bf16.msra.mxu0 0
    %1406 = vmatprep.subr.bf16.mxu0 0
    %1407 = vmatpush2.bf16.msra.mxu0 0
    %1408 = vmatprep.subr.bf16.mxu0 0
    %1409 = vmatpush2.bf16.msra.mxu0 0
    %1410 = vmatprep.subr.bf16.mxu0 0
    %1411 = vmatpush2.bf16.msra.mxu0 0
    %1412 = vmatprep.subr.bf16.mxu0 0
    %1413 = vmatpush2.bf16.msra.mxu0 0
    %1414 = vmatprep.subr.bf16.mxu0 0
    %1415 = vmatpush2.bf16.msra.mxu0 0
    %1416 = vmatprep.subr.bf16.mxu0 0
    %1417 = vmatpush2.bf16.msra.mxu0 0
    %1418 = vmatprep.subr.bf16.mxu0 0
    %1419 = vmatpush2.bf16.msra.mxu0 0
    %1420 = vmatprep.mubr.bf16.mxu0 0
    %1421 = vmatmul.mubr.bf16.gmra.mxu0 %v1383
    %v1422 = vpop.f32.mrf.mxu0
    %v1423 = vadd.f32 0.0, %v1422
    %v1424 = vpop.f32.mrf.mxu0
    %v1425 = vpop.f32.mrf.mxu0
    %v1426 = vpop.f32.mrf.mxu0
    %1427 = vdwg.mxu0
    %1428 = vrot.lane.b32.xlu0 %v151, 120
    %v1429 = vpop.permute.xlu0 %1428
    %v1431 = vsel %vm946, %v1129, 0
    %v1434 = vsel %vm1144, %v1429, 0
    %1436 = vmatprep.subr.bf16.mxu0 0
    %1437 = vmatpush1.bf16.msra.mxu0 0
    %1438 = vmatprep.subr.bf16.mxu0 0
    %1439 = vmatpush1.bf16.msra.mxu0 0
    %1440 = vmatprep.subr.bf16.mxu0 0
    %1441 = vmatpush1.bf16.msra.mxu0 0
    %1442 = vmatprep.subr.bf16.mxu0 0
    %1443 = vmatpush1.bf16.msra.mxu0 0
    %1444 = vmatprep.subr.bf16.mxu0 0
    %1445 = vmatpush1.bf16.msra.mxu0 0
    %1446 = vmatprep.subr.bf16.mxu0 0
    %1447 = vmatpush1.bf16.msra.mxu0 0
    %1448 = vmatprep.subr.bf16.mxu0 0
    %1449 = vmatpush1.bf16.msra.mxu0 0
    %1450 = vmatprep.subr.bf16.mxu0 0
    %1451 = vmatpush1.bf16.msra.mxu0 %v1434
    %1452 = vmatprep.subr.bf16.mxu0 0
    %1453 = vmatpush2.bf16.msra.mxu0 0
    %1454 = vmatprep.subr.bf16.mxu0 0
    %1455 = vmatpush2.bf16.msra.mxu0 0
    %1456 = vmatprep.subr.bf16.mxu0 0
    %1457 = vmatpush2.bf16.msra.mxu0 0
    %1458 = vmatprep.subr.bf16.mxu0 0
    %1459 = vmatpush2.bf16.msra.mxu0 0
    %1460 = vmatprep.subr.bf16.mxu0 0
    %1461 = vmatpush2.bf16.msra.mxu0 0
    %1462 = vmatprep.subr.bf16.mxu0 0
    %1463 = vmatpush2.bf16.msra.mxu0 0
    %1464 = vmatprep.subr.bf16.mxu0 0
    %1465 = vmatpush2.bf16.msra.mxu0 0
    %1466 = vmatprep.subr.bf16.mxu0 0
    %1467 = vmatpush2.bf16.msra.mxu0 0
    %1468 = vmatprep.mubr.bf16.mxu0 0
    %1469 = vmatmul.mubr.bf16.gmra.mxu0 %v1431
    %v1470 = vpop.f32.mrf.mxu0
    %v1471 = vadd.f32 0.0, %v1470
    %v1472 = vpop.f32.mrf.mxu0
    %v1473 = vpop.f32.mrf.mxu0
    %v1474 = vpop.f32.mrf.mxu0
    %1475 = vdwg.mxu0
    %1476 = vrot.lane.b32.xlu0 %v152, 120
    %v1477 = vpop.permute.xlu0 %1476
    %v1479 = vsel %vm946, %v1130, 0
    %v1482 = vsel %vm1144, %v1477, 0
    %1484 = vmatprep.subr.bf16.mxu0 0
    %1485 = vmatpush1.bf16.msra.mxu0 0
    %1486 = vmatprep.subr.bf16.mxu0 0
    %1487 = vmatpush1.bf16.msra.mxu0 0
    %1488 = vmatprep.subr.bf16.mxu0 0
    %1489 = vmatpush1.bf16.msra.mxu0 0
    %1490 = vmatprep.subr.bf16.mxu0 0
    %1491 = vmatpush1.bf16.msra.mxu0 0
    %1492 = vmatprep.subr.bf16.mxu0 0
    %1493 = vmatpush1.bf16.msra.mxu0 0
    %1494 = vmatprep.subr.bf16.mxu0 0
    %1495 = vmatpush1.bf16.msra.mxu0 0
    %1496 = vmatprep.subr.bf16.mxu0 0
    %1497 = vmatpush1.bf16.msra.mxu0 0
    %1498 = vmatprep.subr.bf16.mxu0 0
    %1499 = vmatpush1.bf16.msra.mxu0 %v1482
    %1500 = vmatprep.subr.bf16.mxu0 0
    %1501 = vmatpush2.bf16.msra.mxu0 0
    %1502 = vmatprep.subr.bf16.mxu0 0
    %1503 = vmatpush2.bf16.msra.mxu0 0
    %1504 = vmatprep.subr.bf16.mxu0 0
    %1505 = vmatpush2.bf16.msra.mxu0 0
    %1506 = vmatprep.subr.bf16.mxu0 0
    %1507 = vmatpush2.bf16.msra.mxu0 0
    %1508 = vmatprep.subr.bf16.mxu0 0
    %1509 = vmatpush2.bf16.msra.mxu0 0
    %1510 = vmatprep.subr.bf16.mxu0 0
    %1511 = vmatpush2.bf16.msra.mxu0 0
    %1512 = vmatprep.subr.bf16.mxu0 0
    %1513 = vmatpush2.bf16.msra.mxu0 0
    %1514 = vmatprep.subr.bf16.mxu0 0
    %1515 = vmatpush2.bf16.msra.mxu0 0
    %1516 = vmatprep.mubr.bf16.mxu0 0
    %1517 = vmatmul.mubr.bf16.gmra.mxu0 %v1479
    %v1518 = vpop.f32.mrf.mxu0
    %v1519 = vadd.f32 0.0, %v1518
    %v1520 = vpop.f32.mrf.mxu0
    %v1521 = vpop.f32.mrf.mxu0
    %v1522 = vpop.f32.mrf.mxu0
    %1523 = vdwg.mxu0
    %1524 = vrot.lane.b32.xlu0 %v153, 120
    %v1525 = vpop.permute.xlu0 %1524
    %v1527 = vsel %vm946, %v1131, 0
    %v1530 = vsel %vm1144, %v1525, 0
    %1532 = vmatprep.subr.bf16.mxu0 0
    %1533 = vmatpush1.bf16.msra.mxu0 0
    %1534 = vmatprep.subr.bf16.mxu0 0
    %1535 = vmatpush1.bf16.msra.mxu0 0
    %1536 = vmatprep.subr.bf16.mxu0 0
    %1537 = vmatpush1.bf16.msra.mxu0 0
    %1538 = vmatprep.subr.bf16.mxu0 0
    %1539 = vmatpush1.bf16.msra.mxu0 0
    %1540 = vmatprep.subr.bf16.mxu0 0
    %1541 = vmatpush1.bf16.msra.mxu0 0
    %1542 = vmatprep.subr.bf16.mxu0 0
    %1543 = vmatpush1.bf16.msra.mxu0 0
    %1544 = vmatprep.subr.bf16.mxu0 0
    %1545 = vmatpush1.bf16.msra.mxu0 0
    %1546 = vmatprep.subr.bf16.mxu0 0
    %1547 = vmatpush1.bf16.msra.mxu0 %v1530
    %1548 = vmatprep.subr.bf16.mxu0 0
    %1549 = vmatpush2.bf16.msra.mxu0 0
    %1550 = vmatprep.subr.bf16.mxu0 0
    %1551 = vmatpush2.bf16.msra.mxu0 0
    %1552 = vmatprep.subr.bf16.mxu0 0
    %1553 = vmatpush2.bf16.msra.mxu0 0
    %1554 = vmatprep.subr.bf16.mxu0 0
    %1555 = vmatpush2.bf16.msra.mxu0 0
    %1556 = vmatprep.subr.bf16.mxu0 0
    %1557 = vmatpush2.bf16.msra.mxu0 0
    %1558 = vmatprep.subr.bf16.mxu0 0
    %1559 = vmatpush2.bf16.msra.mxu0 0
    %1560 = vmatprep.subr.bf16.mxu0 0
    %1561 = vmatpush2.bf16.msra.mxu0 0
    %1562 = vmatprep.subr.bf16.mxu0 0
    %1563 = vmatpush2.bf16.msra.mxu0 0
    %1564 = vmatprep.mubr.bf16.mxu0 0
    %1565 = vmatmul.mubr.bf16.gmra.mxu0 %v1527
    %v1566 = vpop.f32.mrf.mxu0
    %v1567 = vadd.f32 0.0, %v1566
    %v1568 = vpop.f32.mrf.mxu0
    %v1569 = vpop.f32.mrf.mxu0
    %v1570 = vpop.f32.mrf.mxu0
    %1571 = vdwg.mxu0
    %1572 = vrot.lane.b32.xlu0 %v154, 120
    %v1573 = vpop.permute.xlu0 %1572
    %v1575 = vsel %vm946, %v1132, 0
    %v1578 = vsel %vm1144, %v1573, 0
    %1580 = vmatprep.subr.bf16.mxu0 0
    %1581 = vmatpush1.bf16.msra.mxu0 0
    %1582 = vmatprep.subr.bf16.mxu0 0
    %1583 = vmatpush1.bf16.msra.mxu0 0
    %1584 = vmatprep.subr.bf16.mxu0 0
    %1585 = vmatpush1.bf16.msra.mxu0 0
    %1586 = vmatprep.subr.bf16.mxu0 0
    %1587 = vmatpush1.bf16.msra.mxu0 0
    %1588 = vmatprep.subr.bf16.mxu0 0
    %1589 = vmatpush1.bf16.msra.mxu0 0
    %1590 = vmatprep.subr.bf16.mxu0 0
    %1591 = vmatpush1.bf16.msra.mxu0 0
    %1592 = vmatprep.subr.bf16.mxu0 0
    %1593 = vmatpush1.bf16.msra.mxu0 0
    %1594 = vmatprep.subr.bf16.mxu0 0
    %1595 = vmatpush1.bf16.msra.mxu0 %v1578
    %1596 = vmatprep.subr.bf16.mxu0 0
    %1597 = vmatpush2.bf16.msra.mxu0 0
    %1598 = vmatprep.subr.bf16.mxu0 0
    %1599 = vmatpush2.bf16.msra.mxu0 0
    %1600 = vmatprep.subr.bf16.mxu0 0
    %1601 = vmatpush2.bf16.msra.mxu0 0
    %1602 = vmatprep.subr.bf16.mxu0 0
    %1603 = vmatpush2.bf16.msra.mxu0 0
    %1604 = vmatprep.subr.bf16.mxu0 0
    %1605 = vmatpush2.bf16.msra.mxu0 0
    %1606 = vmatprep.subr.bf16.mxu0 0
    %1607 = vmatpush2.bf16.msra.mxu0 0
    %1608 = vmatprep.subr.bf16.mxu0 0
    %1609 = vmatpush2.bf16.msra.mxu0 0
    %1610 = vmatprep.subr.bf16.mxu0 0
    %1611 = vmatpush2.bf16.msra.mxu0 0
    %1612 = vmatprep.mubr.bf16.mxu0 0
    %1613 = vmatmul.mubr.bf16.gmra.mxu0 %v1575
    %v1614 = vpop.f32.mrf.mxu0
    %v1615 = vadd.f32 0.0, %v1614
    %v1616 = vpop.f32.mrf.mxu0
    %v1617 = vpop.f32.mrf.mxu0
    %v1618 = vpop.f32.mrf.mxu0
    %1619 = vdwg.mxu0
    %1620 = vrot.lane.b32.xlu0 %v155, 120
    %v1621 = vpop.permute.xlu0 %1620
    %v1623 = vsel %vm946, %v1133, 0
    %v1626 = vsel %vm1144, %v1621, 0
    %1628 = vmatprep.subr.bf16.mxu0 0
    %1629 = vmatpush1.bf16.msra.mxu0 0
    %1630 = vmatprep.subr.bf16.mxu0 0
    %1631 = vmatpush1.bf16.msra.mxu0 0
    %1632 = vmatprep.subr.bf16.mxu0 0
    %1633 = vmatpush1.bf16.msra.mxu0 0
    %1634 = vmatprep.subr.bf16.mxu0 0
    %1635 = vmatpush1.bf16.msra.mxu0 0
    %1636 = vmatprep.subr.bf16.mxu0 0
    %1637 = vmatpush1.bf16.msra.mxu0 0
    %1638 = vmatprep.subr.bf16.mxu0 0
    %1639 = vmatpush1.bf16.msra.mxu0 0
    %1640 = vmatprep.subr.bf16.mxu0 0
    %1641 = vmatpush1.bf16.msra.mxu0 0
    %1642 = vmatprep.subr.bf16.mxu0 0
    %1643 = vmatpush1.bf16.msra.mxu0 %v1626
    %1644 = vmatprep.subr.bf16.mxu0 0
    %1645 = vmatpush2.bf16.msra.mxu0 0
    %1646 = vmatprep.subr.bf16.mxu0 0
    %1647 = vmatpush2.bf16.msra.mxu0 0
    %1648 = vmatprep.subr.bf16.mxu0 0
    %1649 = vmatpush2.bf16.msra.mxu0 0
    %1650 = vmatprep.subr.bf16.mxu0 0
    %1651 = vmatpush2.bf16.msra.mxu0 0
    %1652 = vmatprep.subr.bf16.mxu0 0
    %1653 = vmatpush2.bf16.msra.mxu0 0
    %1654 = vmatprep.subr.bf16.mxu0 0
    %1655 = vmatpush2.bf16.msra.mxu0 0
    %1656 = vmatprep.subr.bf16.mxu0 0
    %1657 = vmatpush2.bf16.msra.mxu0 0
    %1658 = vmatprep.subr.bf16.mxu0 0
    %1659 = vmatpush2.bf16.msra.mxu0 0
    %1660 = vmatprep.mubr.bf16.mxu0 0
    %1661 = vmatmul.mubr.bf16.gmra.mxu0 %v1623
    %v1662 = vpop.f32.mrf.mxu0
    %v1663 = vadd.f32 0.0, %v1662
    %v1664 = vpop.f32.mrf.mxu0
    %v1665 = vpop.f32.mrf.mxu0
    %v1666 = vpop.f32.mrf.mxu0
    %1667 = vdwg.mxu0
    %1668 = vrot.lane.b32.xlu0 %v156, 120
    %v1669 = vpop.permute.xlu0 %1668
    %v1671 = vsel %vm946, %v1134, 0
    %v1674 = vsel %vm1144, %v1669, 0
    %1676 = vmatprep.subr.bf16.mxu0 0
    %1677 = vmatpush1.bf16.msra.mxu0 0
    %1678 = vmatprep.subr.bf16.mxu0 0
    %1679 = vmatpush1.bf16.msra.mxu0 0
    %1680 = vmatprep.subr.bf16.mxu0 0
    %1681 = vmatpush1.bf16.msra.mxu0 0
    %1682 = vmatprep.subr.bf16.mxu0 0
    %1683 = vmatpush1.bf16.msra.mxu0 0
    %1684 = vmatprep.subr.bf16.mxu0 0
    %1685 = vmatpush1.bf16.msra.mxu0 0
    %1686 = vmatprep.subr.bf16.mxu0 0
    %1687 = vmatpush1.bf16.msra.mxu0 0
    %1688 = vmatprep.subr.bf16.mxu0 0
    %1689 = vmatpush1.bf16.msra.mxu0 0
    %1690 = vmatprep.subr.bf16.mxu0 0
    %1691 = vmatpush1.bf16.msra.mxu0 %v1674
    %1692 = vmatprep.subr.bf16.mxu0 0
    %1693 = vmatpush2.bf16.msra.mxu0 0
    %1694 = vmatprep.subr.bf16.mxu0 0
    %1695 = vmatpush2.bf16.msra.mxu0 0
    %1696 = vmatprep.subr.bf16.mxu0 0
    %1697 = vmatpush2.bf16.msra.mxu0 0
    %1698 = vmatprep.subr.bf16.mxu0 0
    %1699 = vmatpush2.bf16.msra.mxu0 0
    %1700 = vmatprep.subr.bf16.mxu0 0
    %1701 = vmatpush2.bf16.msra.mxu0 0
    %1702 = vmatprep.subr.bf16.mxu0 0
    %1703 = vmatpush2.bf16.msra.mxu0 0
    %1704 = vmatprep.subr.bf16.mxu0 0
    %1705 = vmatpush2.bf16.msra.mxu0 0
    %1706 = vmatprep.subr.bf16.mxu0 0
    %1707 = vmatpush2.bf16.msra.mxu0 0
    %1708 = vmatprep.mubr.bf16.mxu0 0
    %1709 = vmatmul.mubr.bf16.gmra.mxu0 %v1671
    %v1710 = vpop.f32.mrf.mxu0
    %v1711 = vadd.f32 0.0, %v1710
    %v1712 = vpop.f32.mrf.mxu0
    %v1713 = vpop.f32.mrf.mxu0
    %v1714 = vpop.f32.mrf.mxu0
    %1715 = vdwg.mxu0
    %1716 = vrot.lane.b32.xlu0 %v157, 120
    %v1717 = vpop.permute.xlu0 %1716
    %v1719 = vsel %vm946, %v1135, 0
    %v1722 = vsel %vm1144, %v1717, 0
    %1724 = vmatprep.subr.bf16.mxu0 0
    %1725 = vmatpush1.bf16.msra.mxu0 0
    %1726 = vmatprep.subr.bf16.mxu0 0
    %1727 = vmatpush1.bf16.msra.mxu0 0
    %1728 = vmatprep.subr.bf16.mxu0 0
    %1729 = vmatpush1.bf16.msra.mxu0 0
    %1730 = vmatprep.subr.bf16.mxu0 0
    %1731 = vmatpush1.bf16.msra.mxu0 0
    %1732 = vmatprep.subr.bf16.mxu0 0
    %1733 = vmatpush1.bf16.msra.mxu0 0
    %1734 = vmatprep.subr.bf16.mxu0 0
    %1735 = vmatpush1.bf16.msra.mxu0 0
    %1736 = vmatprep.subr.bf16.mxu0 0
    %1737 = vmatpush1.bf16.msra.mxu0 0
    %1738 = vmatprep.subr.bf16.mxu0 0
    %1739 = vmatpush1.bf16.msra.mxu0 %v1722
    %1740 = vmatprep.subr.bf16.mxu0 0
    %1741 = vmatpush2.bf16.msra.mxu0 0
    %1742 = vmatprep.subr.bf16.mxu0 0
    %1743 = vmatpush2.bf16.msra.mxu0 0
    %1744 = vmatprep.subr.bf16.mxu0 0
    %1745 = vmatpush2.bf16.msra.mxu0 0
    %1746 = vmatprep.subr.bf16.mxu0 0
    %1747 = vmatpush2.bf16.msra.mxu0 0
    %1748 = vmatprep.subr.bf16.mxu0 0
    %1749 = vmatpush2.bf16.msra.mxu0 0
    %1750 = vmatprep.subr.bf16.mxu0 0
    %1751 = vmatpush2.bf16.msra.mxu0 0
    %1752 = vmatprep.subr.bf16.mxu0 0
    %1753 = vmatpush2.bf16.msra.mxu0 0
    %1754 = vmatprep.subr.bf16.mxu0 0
    %1755 = vmatpush2.bf16.msra.mxu0 0
    %1756 = vmatprep.mubr.bf16.mxu0 0
    %1757 = vmatmul.mubr.bf16.gmra.mxu0 %v1719
    %v1758 = vpop.f32.mrf.mxu0
    %v1759 = vadd.f32 0.0, %v1758
    %v1760 = vpop.f32.mrf.mxu0
    %v1761 = vpop.f32.mrf.mxu0
    %v1762 = vpop.f32.mrf.mxu0
    %1763 = vdwg.mxu0
    %1764 = vrot.lane.b32.xlu0 %v158, 120
    %v1765 = vpop.permute.xlu0 %1764
    %v1767 = vsel %vm946, %v1136, 0
    %v1770 = vsel %vm1144, %v1765, 0
    %1772 = vmatprep.subr.bf16.mxu0 0
    %1773 = vmatpush1.bf16.msra.mxu0 0
    %1774 = vmatprep.subr.bf16.mxu0 0
    %1775 = vmatpush1.bf16.msra.mxu0 0
    %1776 = vmatprep.subr.bf16.mxu0 0
    %1777 = vmatpush1.bf16.msra.mxu0 0
    %1778 = vmatprep.subr.bf16.mxu0 0
    %1779 = vmatpush1.bf16.msra.mxu0 0
    %1780 = vmatprep.subr.bf16.mxu0 0
    %1781 = vmatpush1.bf16.msra.mxu0 0
    %1782 = vmatprep.subr.bf16.mxu0 0
    %1783 = vmatpush1.bf16.msra.mxu0 0
    %1784 = vmatprep.subr.bf16.mxu0 0
    %1785 = vmatpush1.bf16.msra.mxu0 0
    %1786 = vmatprep.subr.bf16.mxu0 0
    %1787 = vmatpush1.bf16.msra.mxu0 %v1770
    %1788 = vmatprep.subr.bf16.mxu0 0
    %1789 = vmatpush2.bf16.msra.mxu0 0
    %1790 = vmatprep.subr.bf16.mxu0 0
    %1791 = vmatpush2.bf16.msra.mxu0 0
    %1792 = vmatprep.subr.bf16.mxu0 0
    %1793 = vmatpush2.bf16.msra.mxu0 0
    %1794 = vmatprep.subr.bf16.mxu0 0
    %1795 = vmatpush2.bf16.msra.mxu0 0
    %1796 = vmatprep.subr.bf16.mxu0 0
    %1797 = vmatpush2.bf16.msra.mxu0 0
    %1798 = vmatprep.subr.bf16.mxu0 0
    %1799 = vmatpush2.bf16.msra.mxu0 0
    %1800 = vmatprep.subr.bf16.mxu0 0
    %1801 = vmatpush2.bf16.msra.mxu0 0
    %1802 = vmatprep.subr.bf16.mxu0 0
    %1803 = vmatpush2.bf16.msra.mxu0 0
    %1804 = vmatprep.mubr.bf16.mxu0 0
    %1805 = vmatmul.mubr.bf16.gmra.mxu0 %v1767
    %v1806 = vpop.f32.mrf.mxu0
    %v1807 = vadd.f32 0.0, %v1806
    %v1808 = vpop.f32.mrf.mxu0
    %v1809 = vpop.f32.mrf.mxu0
    %v1810 = vpop.f32.mrf.mxu0
    %1811 = vdwg.mxu0
    %1812 = vrot.lane.b32.xlu0 %v159, 120
    %v1813 = vpop.permute.xlu0 %1812
    %v1815 = vsel %vm946, %v1137, 0
    %v1818 = vsel %vm1144, %v1813, 0
    %1820 = vmatprep.subr.bf16.mxu0 0
    %1821 = vmatpush1.bf16.msra.mxu0 0
    %1822 = vmatprep.subr.bf16.mxu0 0
    %1823 = vmatpush1.bf16.msra.mxu0 0
    %1824 = vmatprep.subr.bf16.mxu0 0
    %1825 = vmatpush1.bf16.msra.mxu0 0
    %1826 = vmatprep.subr.bf16.mxu0 0
    %1827 = vmatpush1.bf16.msra.mxu0 0
    %1828 = vmatprep.subr.bf16.mxu0 0
    %1829 = vmatpush1.bf16.msra.mxu0 0
    %1830 = vmatprep.subr.bf16.mxu0 0
    %1831 = vmatpush1.bf16.msra.mxu0 0
    %1832 = vmatprep.subr.bf16.mxu0 0
    %1833 = vmatpush1.bf16.msra.mxu0 0
    %1834 = vmatprep.subr.bf16.mxu0 0
    %1835 = vmatpush1.bf16.msra.mxu0 %v1818
    %1836 = vmatprep.subr.bf16.mxu0 0
    %1837 = vmatpush2.bf16.msra.mxu0 0
    %1838 = vmatprep.subr.bf16.mxu0 0
    %1839 = vmatpush2.bf16.msra.mxu0 0
    %1840 = vmatprep.subr.bf16.mxu0 0
    %1841 = vmatpush2.bf16.msra.mxu0 0
    %1842 = vmatprep.subr.bf16.mxu0 0
    %1843 = vmatpush2.bf16.msra.mxu0 0
    %1844 = vmatprep.subr.bf16.mxu0 0
    %1845 = vmatpush2.bf16.msra.mxu0 0
    %1846 = vmatprep.subr.bf16.mxu0 0
    %1847 = vmatpush2.bf16.msra.mxu0 0
    %1848 = vmatprep.subr.bf16.mxu0 0
    %1849 = vmatpush2.bf16.msra.mxu0 0
    %1850 = vmatprep.subr.bf16.mxu0 0
    %1851 = vmatpush2.bf16.msra.mxu0 0
    %1852 = vmatprep.mubr.bf16.mxu0 0
    %1853 = vmatmul.mubr.bf16.gmra.mxu0 %v1815
    %v1854 = vpop.f32.mrf.mxu0
    %v1855 = vadd.f32 0.0, %v1854
    %v1856 = vpop.f32.mrf.mxu0
    %v1857 = vpop.f32.mrf.mxu0
    %v1858 = vpop.f32.mrf.mxu0
    %1859 = vdwg.mxu0
    %1860 = vrot.lane.b32.xlu0 %v160, 120
    %v1861 = vpop.permute.xlu0 %1860
    %v1863 = vsel %vm946, %v1138, 0
    %v1866 = vsel %vm1144, %v1861, 0
    %1868 = vmatprep.subr.bf16.mxu0 0
    %1869 = vmatpush1.bf16.msra.mxu0 0
    %1870 = vmatprep.subr.bf16.mxu0 0
    %1871 = vmatpush1.bf16.msra.mxu0 0
    %1872 = vmatprep.subr.bf16.mxu0 0
    %1873 = vmatpush1.bf16.msra.mxu0 0
    %1874 = vmatprep.subr.bf16.mxu0 0
    %1875 = vmatpush1.bf16.msra.mxu0 0
    %1876 = vmatprep.subr.bf16.mxu0 0
    %1877 = vmatpush1.bf16.msra.mxu0 0
    %1878 = vmatprep.subr.bf16.mxu0 0
    %1879 = vmatpush1.bf16.msra.mxu0 0
    %1880 = vmatprep.subr.bf16.mxu0 0
    %1881 = vmatpush1.bf16.msra.mxu0 0
    %1882 = vmatprep.subr.bf16.mxu0 0
    %1883 = vmatpush1.bf16.msra.mxu0 %v1866
    %1884 = vmatprep.subr.bf16.mxu0 0
    %1885 = vmatpush2.bf16.msra.mxu0 0
    %1886 = vmatprep.subr.bf16.mxu0 0
    %1887 = vmatpush2.bf16.msra.mxu0 0
    %1888 = vmatprep.subr.bf16.mxu0 0
    %1889 = vmatpush2.bf16.msra.mxu0 0
    %1890 = vmatprep.subr.bf16.mxu0 0
    %1891 = vmatpush2.bf16.msra.mxu0 0
    %1892 = vmatprep.subr.bf16.mxu0 0
    %1893 = vmatpush2.bf16.msra.mxu0 0
    %1894 = vmatprep.subr.bf16.mxu0 0
    %1895 = vmatpush2.bf16.msra.mxu0 0
    %1896 = vmatprep.subr.bf16.mxu0 0
    %1897 = vmatpush2.bf16.msra.mxu0 0
    %1898 = vmatprep.subr.bf16.mxu0 0
    %1899 = vmatpush2.bf16.msra.mxu0 0
    %1900 = vmatprep.mubr.bf16.mxu0 0
    %1901 = vmatmul.mubr.bf16.gmra.mxu0 %v1863
    %v1902 = vpop.f32.mrf.mxu0
    %v1903 = vadd.f32 0.0, %v1902
    %v1904 = vpop.f32.mrf.mxu0
    %v1905 = vpop.f32.mrf.mxu0
    %v1906 = vpop.f32.mrf.mxu0
    %1907 = vdwg.mxu0
    %1909 = vrot.lane.b32.xlu0 %v1231, 4
    %v1910 = vpop.permute.xlu0 %1909
    %1913 = vrot.lane.b32.xlu0 %v1279, 8
    %v1914 = vpop.permute.xlu0 %1913
    %1917 = vrot.lane.b32.xlu0 %v1327, 12
    %v1918 = vpop.permute.xlu0 %1917
    %1921 = vrot.lane.b32.xlu0 %v1375, 16
    %v1922 = vpop.permute.xlu0 %1921
    %1925 = vrot.lane.b32.xlu0 %v1423, 20
    %v1926 = vpop.permute.xlu0 %1925
    %1929 = vrot.lane.b32.xlu0 %v1471, 24
    %v1930 = vpop.permute.xlu0 %1929
    %1933 = vrot.lane.b32.xlu0 %v1519, 28
    %v1934 = vpop.permute.xlu0 %1933
    %v1936 = vsel %vm164, %v1183, %v1910
    %v1937 = vsel %vm946, %v1936, %v1914
    %vm1938 = vcmask 97280
    %v1939 = vsel %vm1938, %v1937, %v1918
    %vm1940 = vcmask 130048
    %v1941 = vsel %vm1940, %v1939, %v1922
    %vm1942 = vcmask 162816
    %v1943 = vsel %vm1942, %v1941, %v1926
    %vm1944 = vcmask 195584
    %v1945 = vsel %vm1944, %v1943, %v1930
    %vm1946 = vcmask 228352
    %v1947 = vsel %vm1946, %v1945, %v1934
    %1949 = vrot.lane.b32.xlu0 %v1615, 4
    %v1950 = vpop.permute.xlu0 %1949
    %1953 = vrot.lane.b32.xlu0 %v1663, 8
    %v1954 = vpop.permute.xlu0 %1953
    %1957 = vrot.lane.b32.xlu0 %v1711, 12
    %v1958 = vpop.permute.xlu0 %1957
    %1961 = vrot.lane.b32.xlu0 %v1759, 16
    %v1962 = vpop.permute.xlu0 %1961
    %1965 = vrot.lane.b32.xlu0 %v1807, 20
    %v1966 = vpop.permute.xlu0 %1965
    %1969 = vrot.lane.b32.xlu0 %v1855, 24
    %v1970 = vpop.permute.xlu0 %1969
    %1973 = vrot.lane.b32.xlu0 %v1903, 28
    %v1974 = vpop.permute.xlu0 %1973
    %v1976 = vsel %vm164, %v1567, %v1950
    %v1977 = vsel %vm946, %v1976, %v1954
    %v1978 = vsel %vm1938, %v1977, %v1958
    %v1979 = vsel %vm1940, %v1978, %v1962
    %v1980 = vsel %vm1942, %v1979, %v1966
    %v1981 = vsel %vm1944, %v1980, %v1970
    %v1982 = vsel %vm1946, %v1981, %v1974
    %v1983 = vpack.c.bf16 %v1982, %v1947
    %v1984 = vld [vmem:[%s2] sm:$0xf]
    %v1985 = vld [vmem:[%s2 + $0x4] sm:$0xf]
    %v1986 = vld [vmem:[%s2 + $0x8] sm:$0xf]
    %v1987 = vld [vmem:[%s2 + $0xc] sm:$0xf]
    %v1988 = vlaneseq
    %v1989 = vshrl.u32 %v1988, 7
    %v1990 = vsub.s32 0, %v1989
    %v1991 = vrot.slane %v29, %v1990
    %v1996 = vunpack.c.l.b16 %v1984
    %v1997 = vunpack.c.l.b16 %v1985
    %v1998 = vunpack.c.l.b16 %v1986
    %v1999 = vunpack.c.l.b16 %v1987
    %v2000 = vpack.c.b16 %v1997, %v1996
    %v2001 = vpack.c.b16 %v1999, %v1998
    %v2005 = vsel %vm56, %v1983, 0
    %2007 = vmatprep.subr.bf16.mxu0 0
    %2008 = vmatpush1.bf16.msra.mxu0 0
    %2009 = vmatprep.subr.bf16.mxu0 0
    %2010 = vmatpush1.bf16.msra.mxu0 0
    %2011 = vmatprep.subr.bf16.mxu0 0
    %2012 = vmatpush1.bf16.msra.mxu0 0
    %2013 = vmatprep.subr.bf16.mxu0 0
    %2014 = vmatpush1.bf16.msra.mxu0 0
    %2015 = vmatprep.subr.bf16.mxu0 0
    %2016 = vmatpush1.bf16.msra.mxu0 0
    %2017 = vmatprep.subr.bf16.mxu0 0
    %2018 = vmatpush1.bf16.msra.mxu0 0
    %2019 = vmatprep.subr.bf16.mxu0 0
    %2020 = vmatpush1.bf16.msra.mxu0 %v2001
    %2021 = vmatprep.subr.bf16.mxu0 0
    %2022 = vmatpush1.bf16.msra.mxu0 %v2000
    %2023 = vmatprep.subr.bf16.mxu0 0
    %2024 = vmatpush2.bf16.msra.mxu0 0
    %2025 = vmatprep.subr.bf16.mxu0 0
    %2026 = vmatpush2.bf16.msra.mxu0 0
    %2027 = vmatprep.subr.bf16.mxu0 0
    %2028 = vmatpush2.bf16.msra.mxu0 0
    %2029 = vmatprep.subr.bf16.mxu0 0
    %2030 = vmatpush2.bf16.msra.mxu0 0
    %2031 = vmatprep.subr.bf16.mxu0 0
    %2032 = vmatpush2.bf16.msra.mxu0 0
    %2033 = vmatprep.subr.bf16.mxu0 0
    %2034 = vmatpush2.bf16.msra.mxu0 0
    %2035 = vmatprep.subr.bf16.mxu0 0
    %2036 = vmatpush2.bf16.msra.mxu0 0
    %2037 = vmatprep.subr.bf16.mxu0 0
    %2038 = vmatpush2.bf16.msra.mxu0 0
    %2039 = vmatprep.mubr.bf16.mxu0 0
    %2040 = vmatmul.mubr.bf16.gmra.mxu0 %v2005
    %v2041 = vpop.f32.mrf.mxu0
    %v2042 = vadd.f32 %v1991, %v2041
    %v2043 = vpop.f32.mrf.mxu0
    %v2044 = vpop.f32.mrf.mxu0
    %v2045 = vadd.f32 %v1991, %v2044
    %v2046 = vpop.f32.mrf.mxu0
    %2047 = vdwg.mxu0
    %v2048 = vadd.f32 %v25, %v2042
    %v2049 = vadd.f32 %v26, %v2045
    %v2050 = vsel %vm56, %v2048, 0.0
    %2051 = vadd.xlane.f32.xlu0 %v2050
    %v2052 = vpop.xlane.xlu0 %2051
    %v2053 = vsel %vm56, %v2049, 0.0
    %2054 = vadd.xlane.f32.xlu0 %v2053
    %v2055 = vpop.xlane.xlu0 %2054
    %v2056 = vrcp.pop 32.0
    %v2057 = vmul.f32 %v2052, %v2056
    %v2058 = vmul.f32 %v2055, %v2056
    %v2059 = vsub.f32 %v2048, %v2057
    %v2060 = vsub.f32 %v2049, %v2058
    %v2061 = vmul.f32 %v2059, %v2059
    %v2062 = vmul.f32 %v2060, %v2060
    %v2063 = vsel %vm56, %v2061, 0.0
    %2064 = vadd.xlane.f32.xlu0 %v2063
    %v2065 = vpop.xlane.xlu0 %2064
    %v2066 = vsel %vm56, %v2062, 0.0
    %2067 = vadd.xlane.f32.xlu0 %v2066
    %v2068 = vpop.xlane.xlu0 %2067
    %v2069 = vmul.f32 %v2065, %v2056
    %v2070 = vmul.f32 %v2068, %v2056
    %v2071 = vadd.f32 %v2069, 1e-05
    %v2072 = vadd.f32 %v2070, 1e-05
    %v2073 = vrsqrt.pop %v2071
    %v2074 = vrsqrt.pop %v2072
    %v2075 = vmul.f32 %v2059, %v2073
    %v2076 = vmul.f32 %v2060, %v2074
    %v2077 = vlaneseq
    %v2078 = vshrl.u32 %v2077, 7
    %v2079 = vsub.s32 0, %v2078
    %v2080 = vrot.slane %v30, %v2079
    %v2081 = vmul.f32 %v2075, %v2080
    %v2082 = vmul.f32 %v2076, %v2080
    %v2083 = vlaneseq
    %v2084 = vshrl.u32 %v2083, 7
    %v2085 = vsub.s32 0, %v2084
    %v2086 = vrot.slane %v31, %v2085
    %v2087 = vadd.f32 %v2081, %v2086
    %v2088 = vadd.f32 %v2082, %v2086
    %v2089 = vpack.c.bf16 %v2088, %v2087
    %v2090 = vld [vmem:[%s3] sm:$0xf]
    %v2091 = vld [vmem:[%s3 + $0x4] sm:$0xf]
    %v2092 = vld [vmem:[%s3 + $0x8] sm:$0xf]
    %v2093 = vld [vmem:[%s3 + $0xc] sm:$0xf]
    %v2094 = vlaneseq
    %v2095 = vshrl.u32 %v2094, 7
    %v2096 = vsub.s32 0, %v2095
    %v2097 = vrot.slane %v32, %v2096
    %v2102 = vunpack.c.l.b16 %v2090
    %v2103 = vunpack.c.l.b16 %v2091
    %v2104 = vunpack.c.l.b16 %v2092
    %v2105 = vunpack.c.l.b16 %v2093
    %v2106 = vpack.c.b16 %v2103, %v2102
    %v2107 = vpack.c.b16 %v2105, %v2104
    %v2111 = vsel %vm56, %v2089, 0
    %2113 = vmatprep.subr.bf16.mxu0 0
    %2114 = vmatpush1.bf16.msra.mxu0 0
    %2115 = vmatprep.subr.bf16.mxu0 0
    %2116 = vmatpush1.bf16.msra.mxu0 0
    %2117 = vmatprep.subr.bf16.mxu0 0
    %2118 = vmatpush1.bf16.msra.mxu0 0
    %2119 = vmatprep.subr.bf16.mxu0 0
    %2120 = vmatpush1.bf16.msra.mxu0 0
    %2121 = vmatprep.subr.bf16.mxu0 0
    %2122 = vmatpush1.bf16.msra.mxu0 0
    %2123 = vmatprep.subr.bf16.mxu0 0
    %2124 = vmatpush1.bf16.msra.mxu0 0
    %2125 = vmatprep.subr.bf16.mxu0 0
    %2126 = vmatpush1.bf16.msra.mxu0 %v2107
    %2127 = vmatprep.subr.bf16.mxu0 0
    %2128 = vmatpush1.bf16.msra.mxu0 %v2106
    %2129 = vmatprep.subr.bf16.mxu0 0
    %2130 = vmatpush2.bf16.msra.mxu0 0
    %2131 = vmatprep.subr.bf16.mxu0 0
    %2132 = vmatpush2.bf16.msra.mxu0 0
    %2133 = vmatprep.subr.bf16.mxu0 0
    %2134 = vmatpush2.bf16.msra.mxu0 0
    %2135 = vmatprep.subr.bf16.mxu0 0
    %2136 = vmatpush2.bf16.msra.mxu0 0
    %2137 = vmatprep.subr.bf16.mxu0 0
    %2138 = vmatpush2.bf16.msra.mxu0 0
    %2139 = vmatprep.subr.bf16.mxu0 0
    %2140 = vmatpush2.bf16.msra.mxu0 0
    %2141 = vmatprep.subr.bf16.mxu0 0
    %2142 = vmatpush2.bf16.msra.mxu0 0
    %2143 = vmatprep.subr.bf16.mxu0 0
    %2144 = vmatpush2.bf16.msra.mxu0 0
    %2145 = vmatprep.mubr.bf16.mxu0 0
    %2146 = vmatmul.mubr.bf16.gmra.mxu0 %v2111
    %v2147 = vpop.f32.mrf.mxu0
    %v2148 = vadd.f32 %v2097, %v2147
    %v2149 = vpop.f32.mrf.mxu0
    %v2150 = vpop.f32.mrf.mxu0
    %v2151 = vadd.f32 %v2097, %v2150
    %v2152 = vpop.f32.mrf.mxu0
    %2153 = vdwg.mxu0
    %v2154 = vmul.f32 %v2148, 0.5
    %v2155 = vmul.f32 %v2151, 0.5
    %v2156 = vmul.f32 %v2148, 0.70710677
    %v2157 = vmul.f32 %v2151, 0.70710677
    %v2158 = verf.f32.pop %v2156
    %v2159 = verf.f32.pop %v2157
    %v2160 = vadd.f32 %v2158, 1.0
    %v2161 = vadd.f32 %v2159, 1.0
    %v2162 = vmul.f32 %v2154, %v2160
    %v2163 = vmul.f32 %v2155, %v2161
    %v2164 = vpack.c.bf16 %v2163, %v2162
    %v2165 = vld [vmem:[%s4] sm:$0xf]
    %v2166 = vld [vmem:[%s4 + $0x4] sm:$0xf]
    %v2167 = vld [vmem:[%s4 + $0x8] sm:$0xf]
    %v2168 = vld [vmem:[%s4 + $0xc] sm:$0xf]
    %v2169 = vld [vmem:[%s4 + $0x10] sm:$0xf]
    %v2170 = vld [vmem:[%s4 + $0x14] sm:$0xf]
    %v2171 = vld [vmem:[%s4 + $0x18] sm:$0xf]
    %v2172 = vld [vmem:[%s4 + $0x1c] sm:$0xf]
    %v2173 = vld [vmem:[%s4 + $0x20] sm:$0xf]
    %v2174 = vld [vmem:[%s4 + $0x24] sm:$0xf]
    %v2175 = vld [vmem:[%s4 + $0x28] sm:$0xf]
    %v2176 = vld [vmem:[%s4 + $0x2c] sm:$0xf]
    %v2177 = vld [vmem:[%s4 + $0x30] sm:$0xf]
    %v2178 = vld [vmem:[%s4 + $0x34] sm:$0xf]
    %v2179 = vld [vmem:[%s4 + $0x38] sm:$0xf]
    %v2180 = vld [vmem:[%s4 + $0x3c] sm:$0xf]
    %v2181 = vlaneseq
    %v2182 = vshrl.u32 %v2181, 7
    %v2183 = vsub.s32 0, %v2182
    %v2184 = vrot.slane %v33, %v2183
    %v2201 = vunpack.c.l.b16 %v2165
    %v2202 = vunpack.c.l.b16 %v2166
    %v2203 = vunpack.c.l.b16 %v2167
    %v2204 = vunpack.c.l.b16 %v2168
    %v2205 = vunpack.c.l.b16 %v2169
    %v2206 = vunpack.c.l.b16 %v2170
    %v2207 = vunpack.c.l.b16 %v2171
    %v2208 = vunpack.c.l.b16 %v2172
    %v2209 = vunpack.c.l.b16 %v2173
    %v2210 = vunpack.c.l.b16 %v2174
    %v2211 = vunpack.c.l.b16 %v2175
    %v2212 = vunpack.c.l.b16 %v2176
    %v2213 = vunpack.c.l.b16 %v2177
    %v2214 = vunpack.c.l.b16 %v2178
    %v2215 = vunpack.c.l.b16 %v2179
    %v2216 = vunpack.c.l.b16 %v2180
    %v2217 = vpack.c.b16 %v2202, %v2201
    %v2218 = vpack.c.b16 %v2204, %v2203
    %v2219 = vpack.c.b16 %v2206, %v2205
    %v2220 = vpack.c.b16 %v2208, %v2207
    %v2221 = vpack.c.b16 %v2210, %v2209
    %v2222 = vpack.c.b16 %v2212, %v2211
    %v2223 = vpack.c.b16 %v2214, %v2213
    %v2224 = vpack.c.b16 %v2216, %v2215
    %2233 = vmatprep.subr.bf16.mxu0 0
    %2234 = vmatpush1.bf16.msra.mxu0 %v2224
    %2235 = vmatprep.subr.bf16.mxu0 0
    %2236 = vmatpush1.bf16.msra.mxu0 %v2223
    %2237 = vmatprep.subr.bf16.mxu0 0
    %2238 = vmatpush1.bf16.msra.mxu0 %v2222
    %2239 = vmatprep.subr.bf16.mxu0 0
    %2240 = vmatpush1.bf16.msra.mxu0 %v2221
    %2241 = vmatprep.subr.bf16.mxu0 0
    %2242 = vmatpush1.bf16.msra.mxu0 %v2220
    %2243 = vmatprep.subr.bf16.mxu0 0
    %2244 = vmatpush1.bf16.msra.mxu0 %v2219
    %2245 = vmatprep.subr.bf16.mxu0 0
    %2246 = vmatpush1.bf16.msra.mxu0 %v2218
    %2247 = vmatprep.subr.bf16.mxu0 0
    %2248 = vmatpush1.bf16.msra.mxu0 %v2217
    %2249 = vmatprep.subr.bf16.mxu0 0
    %2250 = vmatpush2.bf16.msra.mxu0 0
    %2251 = vmatprep.subr.bf16.mxu0 0
    %2252 = vmatpush2.bf16.msra.mxu0 0
    %2253 = vmatprep.subr.bf16.mxu0 0
    %2254 = vmatpush2.bf16.msra.mxu0 0
    %2255 = vmatprep.subr.bf16.mxu0 0
    %2256 = vmatpush2.bf16.msra.mxu0 0
    %2257 = vmatprep.subr.bf16.mxu0 0
    %2258 = vmatpush2.bf16.msra.mxu0 0
    %2259 = vmatprep.subr.bf16.mxu0 0
    %2260 = vmatpush2.bf16.msra.mxu0 0
    %2261 = vmatprep.subr.bf16.mxu0 0
    %2262 = vmatpush2.bf16.msra.mxu0 0
    %2263 = vmatprep.subr.bf16.mxu0 0
    %2264 = vmatpush2.bf16.msra.mxu0 0
    %2265 = vmatprep.mubr.bf16.mxu0 0
    %2266 = vmatmul.mubr.bf16.gmra.mxu0 %v2164
    %v2267 = vpop.f32.mrf.mxu0
    %v2268 = vadd.f32 %v2184, %v2267
    %v2269 = vpop.f32.mrf.mxu0
    %v2270 = vpop.f32.mrf.mxu0
    %v2271 = vadd.f32 %v2184, %v2270
    %v2272 = vpop.f32.mrf.mxu0
    %2273 = vdwg.mxu0
    %v2274 = vadd.f32 %v2087, %v2268
    %v2275 = vadd.f32 %v2088, %v2271
    %v2276 = vsel %vm56, %v2274, 0.0
    %2277 = vadd.xlane.f32.xlu0 %v2276
    %v2278 = vpop.xlane.xlu0 %2277
    %v2279 = vsel %vm56, %v2275, 0.0
    %2280 = vadd.xlane.f32.xlu0 %v2279
    %v2281 = vpop.xlane.xlu0 %2280
    %v2282 = vmul.f32 %v2278, %v2056
    %v2283 = vmul.f32 %v2281, %v2056
    %v2284 = vsub.f32 %v2274, %v2282
    %v2285 = vsub.f32 %v2275, %v2283
    %v2286 = vmul.f32 %v2284, %v2284
    %v2287 = vmul.f32 %v2285, %v2285
    %v2288 = vsel %vm56, %v2286, 0.0
    %2289 = vadd.xlane.f32.xlu0 %v2288
    %v2290 = vpop.xlane.xlu0 %2289
    %v2291 = vsel %vm56, %v2287, 0.0
    %2292 = vadd.xlane.f32.xlu0 %v2291
    %v2293 = vpop.xlane.xlu0 %2292
    %v2294 = vmul.f32 %v2290, %v2056
    %v2295 = vmul.f32 %v2293, %v2056
    %v2296 = vadd.f32 %v2294, 1e-05
    %v2297 = vadd.f32 %v2295, 1e-05
    %v2298 = vrsqrt.pop %v2296
    %v2299 = vrsqrt.pop %v2297
    %v2300 = vmul.f32 %v2284, %v2298
    %v2301 = vmul.f32 %v2285, %v2299
    %v2302 = vlaneseq
    %v2303 = vshrl.u32 %v2302, 7
    %v2304 = vsub.s32 0, %v2303
    %v2305 = vrot.slane %v34, %v2304
    %v2306 = vmul.f32 %v2300, %v2305
    %v2307 = vmul.f32 %v2301, %v2305
    %v2308 = vlaneseq
    %v2309 = vshrl.u32 %v2308, 7
    %v2310 = vsub.s32 0, %v2309
    %v2311 = vrot.slane %v35, %v2310
    %v2312 = vadd.f32 %v2306, %v2311
    %v2313 = vadd.f32 %v2307, %v2311
    %2314 = vst.msk [vmem:[#allocation2] sm:$0xff] %vm56, %v2312
    %2315 = vst.msk [vmem:[#allocation2 + $0x8] sm:$0xff] %vm56, %v2313
    // Predicated region
    $region26: #{tpu_custom_call.1} parent=1 // pred_check
      _
    $region27: #{tpu_custom_call.1} parent=1 // pred_check_branch
      %2317 = sbr.rel (0) target = $region29
    $region28: #{tpu_custom_call.1} parent=1 // pred_region
      %s2319 = ssub.s32 256, 256
      %2320 = vsyncadd [#allocation3], %s2319
      %s2321 = sshll.u32 [#allocation2], 4
      %s2322 = int_to_ptr.vmem [resolvable:$true] %s2321
      %2327 = dma.vmem_to_hbm [thread:$0]  %s2322, 256, %s6, [#allocation3], 128, 128, 8
    $region29: #{tpu_custom_call.1} parent=1 // pred_fallthru
      _
    // Predicated region
    $region30: #{tpu_custom_call.1} parent=1 // pred_check
      _
    $region31: #{tpu_custom_call.1} parent=1 // pred_check_branch
      %2329 = sbr.rel (0) target = $region33
    $region32: #{tpu_custom_call.1} parent=1 // pred_region
      %2330 = dma.done [#allocation3], 256
    $region33: #{tpu_custom_call.1} parent=1 // pred_fallthru
      _
    %2331 = vsyncpa [#allocation3], 1

</llo_original>
